<compile_context>
chip_gen: v7x
topology: tpu7x:2x2x1
jax: 0.10.0
libtpu: 0.0.40
codegen_flags: <defaults>
</compile_context>

<pallas_src>
import jax
import jax.numpy as jnp
from jax.experimental import pallas as pl
from jax.experimental.pallas import tpu as pltpu

OUT_LANES = 128  # lane-dense output width; col 0 = q1, col 1 = q2


def critic_kernel(x_ref,
                  wsa_ref, b14_ref,
                  w2_ref, b2_ref, w3_ref, b3_ref,
                  w5_ref, b5_ref, w6_ref, b6_ref,
                  wq_ref, bq_ref,
                  out_ref):
    cdt = wsa_ref.dtype          # MXU operand dtype (bf16); accumulation is f32
    H = w2_ref.shape[0]

    def mm(x, w_ref):
        return jnp.dot(x, w_ref[...], preferred_element_type=jnp.float32)

    def relu_c(x):
        # ReLU in f32, then cast so materialized intermediates are bf16.
        return jnp.maximum(x, 0.0).astype(cdt)

    # Fused first layer of BOTH branches: (tm, S+A) @ (S+A, 2H).
    h = relu_c(mm(x_ref[...].astype(cdt), wsa_ref) + b14_ref[...])
    h1 = h[:, :H]
    h2 = h[:, H:]

    # Per-branch hidden layers (interleaved so VPU ReLU of one branch can
    # overlap MXU work of the other).
    h1 = relu_c(mm(h1, w2_ref) + b2_ref[...])
    h2 = relu_c(mm(h2, w5_ref) + b5_ref[...])
    h1 = relu_c(mm(h1, w3_ref) + b3_ref[...])
    h2 = relu_c(mm(h2, w6_ref) + b6_ref[...])

    # Single fused head matmul: (tm, 2H) @ (2H, 128); zero padding keeps the
    # two branches exactly independent.  One unmasked lane-dense store.
    h12 = jnp.concatenate([h1, h2], axis=1)
    out = mm(h12, wq_ref) + bq_ref[...]
    out_ref[...] = out.astype(out_ref.dtype)


def _round_up(v, m):
    return ((v + m - 1) // m) * m


def _choose_tm(batch, block_batch):
    tm = min(block_batch, batch)
    # Guarantee >= 2 tiles (when the batch is big enough) so v7x's two
    # TensorCores each get a share of the "parallel" grid axis.
    if batch >= 16 and pl.cdiv(batch, tm) < 2:
        tm = pl.cdiv(batch, 2)
    if tm >= batch:
        return batch                 # single full-extent row block (always legal)
    return _round_up(tm, 8)          # tiled: row block must be a multiple of 8


def prepare_critic_params(params, compute_dtype=jnp.bfloat16):
    """Build the kernel's fused parameter layout ONCE (outside the fwd path)."""
    (w1, b1), (w2, b2), (w3, b3), (wq1, bq1), \
        (w4, b4), (w5, b5), (w6, b6), (wq2, bq2) = params
    H = w2.shape[0]

    # Fused first-layer weight / bias: [branch1 | branch2] along the out dim.
    wsa = jnp.concatenate([w1, w4], axis=1).astype(compute_dtype)   # (S+A, 2H)
    b14 = jnp.concatenate([b1, b4], axis=1)                         # (1, 2H) f32

    # Single lane-dense padded head weight: rows 0:H -> col 0 (q1),
    # rows H:2H -> col 1 (q2); everything else exactly zero.
    wq = jnp.zeros((2 * H, OUT_LANES), compute_dtype)
    wq = wq.at[:H, 0].set(wq1[:, 0].astype(compute_dtype))
    wq = wq.at[H:, 1].set(wq2[:, 0].astype(compute_dtype))
    bq = (jnp.zeros((1, OUT_LANES), jnp.float32)
          .at[0, 0].set(bq1[0, 0])
          .at[0, 1].set(bq2[0, 0]))

    return dict(
        wsa=wsa, b14=b14,
        w2=w2.astype(compute_dtype), b2=b2,
        w3=w3.astype(compute_dtype), b3=b3,
        w5=w5.astype(compute_dtype), b5=b5,
        w6=w6.astype(compute_dtype), b6=b6,
        wq=wq, bq=bq,
    )


def critic_forward(state, action, fused, *, block_batch=512):
    """state: (B, S), action: (B, A), fused: prepare_critic_params(...)
    -> (q1, q2), each (B, 1) f32."""
    B = state.shape[0]
    x = jnp.concatenate([state, action], axis=1)   # trivial; fused by XLA
    d_in = x.shape[1]

    tm = _choose_tm(B, block_batch)
    grid = (pl.cdiv(B, tm),)

    def resident(arr):
        # Weights/biases: full-array block, same block every grid step
        # (stays VMEM-resident, DMA'd once).
        return pl.BlockSpec(arr.shape, lambda i: (0, 0))

    in_specs = [
        pl.BlockSpec((tm, d_in), lambda i: (i, 0)),
        resident(fused["wsa"]), resident(fused["b14"]),
        resident(fused["w2"]), resident(fused["b2"]),
        resident(fused["w3"]), resident(fused["b3"]),
        resident(fused["w5"]), resident(fused["b5"]),
        resident(fused["w6"]), resident(fused["b6"]),
        resident(fused["wq"]), resident(fused["bq"]),
    ]

    out = pl.pallas_call(
        critic_kernel,
        out_shape=jax.ShapeDtypeStruct((B, OUT_LANES), jnp.float32),
        grid=grid,
        in_specs=in_specs,
        out_specs=pl.BlockSpec((tm, OUT_LANES), lambda i: (i, 0)),
        compiler_params=pltpu.CompilerParams(
            dimension_semantics=("parallel",)),
    )(x, fused["wsa"], fused["b14"],
      fused["w2"], fused["b2"], fused["w3"], fused["b3"],
      fused["w5"], fused["b5"], fused["w6"], fused["b6"],
      fused["wq"], fused["bq"])

    qs = out[:, :2]            # single read of the output slab
    return qs[:, 0:1], qs[:, 1:2]


# ----------------------- init + pure-JAX reference -----------------------

def xavier_uniform(key, fan_in, fan_out):
    # Matches torch.nn.init.xavier_uniform_ (bound symmetric in fan_in/out);
    # built directly in (in, out) layout for x @ W.
    bound = (6.0 / (fan_in + fan_out)) ** 0.5
    return jax.random.uniform(key, (fan_in, fan_out), jnp.float32, -bound, bound)


def init_critic_params(key, state_dim, action_dim, hidden_dim=256):
    d_in = state_dim + action_dim
    dims = [
        (d_in, hidden_dim), (hidden_dim, hidden_dim), (hidden_dim, hidden_dim), (hidden_dim, 1),  # branch 1
        (d_in, hidden_dim), (hidden_dim, hidden_dim), (hidden_dim, hidden_dim), (hidden_dim, 1),  # branch 2
    ]
    keys = jax.random.split(key, len(dims))
    params = []
    for k, (fi, fo) in zip(keys, dims):
        w = xavier_uniform(k, fi, fo)
        b = jnp.zeros((1, fo), jnp.float32)     # constant_(bias, 0)
        params.append((w, b))
    return params


def critic_reference(state, action, params, compute_dtype=jnp.bfloat16):
    """Pure-JAX reference mirroring the kernel's bf16-operand / f32-accum matmuls."""
    x = jnp.concatenate([state, action], axis=1)

    def lin(h, w, b):
        return jnp.dot(h.astype(compute_dtype), w.astype(compute_dtype),
                       preferred_element_type=jnp.float32) + b

    (w1, b1), (w2, b2), (w3, b3), (wq1, bq1), \
        (w4, b4), (w5, b5), (w6, b6), (wq2, bq2) = params
    h1 = jax.nn.relu(lin(x, w1, b1))
    h1 = jax.nn.relu(lin(h1, w2, b2))
    h1 = jax.nn.relu(lin(h1, w3, b3))
    q1 = lin(h1, wq1, bq1)
    h2 = jax.nn.relu(lin(x, w4, b4))
    h2 = jax.nn.relu(lin(h2, w5, b5))
    h2 = jax.nn.relu(lin(h2, w6, b6))
    q2 = lin(h2, wq2, bq2)
    return q1, q2


if __name__ == "__main__":
    # Small shapes; hidden_dim kept a multiple of 128 so the fused 2H slices
    # and head concat land exactly on lane-tile boundaries.
    state_dim, action_dim, hidden_dim, batch = 12, 4, 128, 64

    key = jax.random.PRNGKey(0)
    k_state, k_action, k_params = jax.random.split(key, 3)

    state = jax.random.normal(k_state, (batch, state_dim), jnp.float32)
    action = jax.random.normal(k_action, (batch, action_dim), jnp.float32)
    params = init_critic_params(k_params, state_dim, action_dim, hidden_dim)

    fused = prepare_critic_params(params)            # built once, reused per call

    # batch=64 with default block_batch -> tm=32, 2 grid steps (exercises the
    # batch-tiled pipeline and megacore splitting on v7x).
    q1, q2 = critic_forward(state, action, fused)
    q1 = jax.block_until_ready(q1)
    q2 = jax.block_until_ready(q2)

    q1_ref, q2_ref = critic_reference(state, action, params)

    assert q1.shape == (batch, 1) and q2.shape == (batch, 1)
    assert jnp.allclose(q1, q1_ref, atol=2e-3, rtol=2e-3), \
        float(jnp.max(jnp.abs(q1 - q1_ref)))
    assert jnp.allclose(q2, q2_ref, atol=2e-3, rtol=2e-3), \
        float(jnp.max(jnp.abs(q2 - q2_ref)))

    print("KERNEL_OK")
</pallas_src>

<mosaic_0001>
module attributes {stable_mosaic.version = 11 : i64} {
  func.func @critic_kernel(%arg0: i32, %arg1: memref<32x16xf32, #tpu.memory_space<vmem>>, %arg2: memref<16x256xbf16, #tpu.memory_space<vmem>>, %arg3: memref<1x256xf32, #tpu.memory_space<vmem>>, %arg4: memref<128x128xbf16, #tpu.memory_space<vmem>>, %arg5: memref<1x128xf32, #tpu.memory_space<vmem>>, %arg6: memref<128x128xbf16, #tpu.memory_space<vmem>>, %arg7: memref<1x128xf32, #tpu.memory_space<vmem>>, %arg8: memref<128x128xbf16, #tpu.memory_space<vmem>>, %arg9: memref<1x128xf32, #tpu.memory_space<vmem>>, %arg10: memref<128x128xbf16, #tpu.memory_space<vmem>>, %arg11: memref<1x128xf32, #tpu.memory_space<vmem>>, %arg12: memref<256x128xbf16, #tpu.memory_space<vmem>>, %arg13: memref<1x128xf32, #tpu.memory_space<vmem>>, %arg14: memref<32x128xf32, #tpu.memory_space<vmem>>) attributes {dimension_semantics = [#tpu.dimension_semantics<parallel>], iteration_bounds = array<i64: 2>, scalar_prefetch = 0 : i64, scratch_operands = 0 : i64, tpu.core_type = #tpu.core_type<tc>, window_params = [{transform_indices = @transform_0, window_bounds = array<i64: 32, 16>}, {pipeline_mode = #tpu.pipeline_mode<synchronous>, transform_indices = @transform_1, window_bounds = array<i64: 16, 256>}, {pipeline_mode = #tpu.pipeline_mode<synchronous>, transform_indices = @transform_2, window_bounds = array<i64: 1, 256>}, {pipeline_mode = #tpu.pipeline_mode<synchronous>, transform_indices = @transform_3, window_bounds = array<i64: 128, 128>}, {pipeline_mode = #tpu.pipeline_mode<synchronous>, transform_indices = @transform_4, window_bounds = array<i64: 1, 128>}, {pipeline_mode = #tpu.pipeline_mode<synchronous>, transform_indices = @transform_5, window_bounds = array<i64: 128, 128>}, {pipeline_mode = #tpu.pipeline_mode<synchronous>, transform_indices = @transform_6, window_bounds = array<i64: 1, 128>}, {pipeline_mode = #tpu.pipeline_mode<synchronous>, transform_indices = @transform_7, window_bounds = array<i64: 128, 128>}, {pipeline_mode = #tpu.pipeline_mode<synchronous>, transform_indices = @transform_8, window_bounds = array<i64: 1, 128>}, {pipeline_mode = #tpu.pipeline_mode<synchronous>, transform_indices = @transform_9, window_bounds = array<i64: 128, 128>}, {pipeline_mode = #tpu.pipeline_mode<synchronous>, transform_indices = @transform_10, window_bounds = array<i64: 1, 128>}, {pipeline_mode = #tpu.pipeline_mode<synchronous>, transform_indices = @transform_11, window_bounds = array<i64: 256, 128>}, {pipeline_mode = #tpu.pipeline_mode<synchronous>, transform_indices = @transform_12, window_bounds = array<i64: 1, 128>}, {transform_indices = @transform_13, window_bounds = array<i64: 32, 128>}]} {
    %c0 = arith.constant 0 : index
    %c0_0 = arith.constant 0 : index
    %0 = vector.load %arg1[%c0, %c0_0] : memref<32x16xf32, #tpu.memory_space<vmem>>, vector<32x16xf32>
    %1 = arith.truncf %0 : vector<32x16xf32> to vector<32x16xbf16>
    %c0_1 = arith.constant 0 : index
    %c0_2 = arith.constant 0 : index
    %2 = vector.load %arg2[%c0_1, %c0_2] : memref<16x256xbf16, #tpu.memory_space<vmem>>, vector<16x256xbf16>
    %cst = arith.constant dense<0.000000e+00> : vector<32x256xf32>
    %3 = tpu.matmul %1, %2, %cst {dimension_numbers = #tpu.dot_dimension_numbers<[1], [0], [0], [1], [0, 0, 1, 1], [], []>} : vector<32x16xbf16>, vector<16x256xbf16>, vector<32x256xf32> -> vector<32x256xf32>
    %c0_3 = arith.constant 0 : index
    %c0_4 = arith.constant 0 : index
    %4 = vector.load %arg3[%c0_3, %c0_4] : memref<1x256xf32, #tpu.memory_space<vmem>>, vector<1x256xf32>
    %5 = vector.broadcast %4 : vector<1x256xf32> to vector<32x256xf32>
    %6 = arith.addf %3, %5 : vector<32x256xf32>
    %cst_5 = arith.constant 0.000000e+00 : f32
    %7 = vector.broadcast %cst_5 : f32 to vector<32x256xf32>
    %8 = arith.maximumf %6, %7 : vector<32x256xf32>
    %9 = arith.truncf %8 : vector<32x256xf32> to vector<32x256xbf16>
    %10 = vector.extract_strided_slice %9 {offsets = [0, 0], sizes = [32, 128], strides = [1, 1]} : vector<32x256xbf16> to vector<32x128xbf16>
    %11 = vector.extract_strided_slice %9 {offsets = [0, 128], sizes = [32, 128], strides = [1, 1]} : vector<32x256xbf16> to vector<32x128xbf16>
    %c0_6 = arith.constant 0 : index
    %c0_7 = arith.constant 0 : index
    %12 = vector.load %arg4[%c0_6, %c0_7] : memref<128x128xbf16, #tpu.memory_space<vmem>>, vector<128x128xbf16>
    %cst_8 = arith.constant dense<0.000000e+00> : vector<32x128xf32>
    %13 = tpu.matmul %10, %12, %cst_8 {dimension_numbers = #tpu.dot_dimension_numbers<[1], [0], [0], [1], [0, 0, 1, 1], [], []>} : vector<32x128xbf16>, vector<128x128xbf16>, vector<32x128xf32> -> vector<32x128xf32>
    %c0_9 = arith.constant 0 : index
    %c0_10 = arith.constant 0 : index
    %14 = vector.load %arg5[%c0_9, %c0_10] : memref<1x128xf32, #tpu.memory_space<vmem>>, vector<1x128xf32>
    %15 = vector.broadcast %14 : vector<1x128xf32> to vector<32x128xf32>
    %16 = arith.addf %13, %15 : vector<32x128xf32>
    %cst_11 = arith.constant 0.000000e+00 : f32
    %17 = vector.broadcast %cst_11 : f32 to vector<32x128xf32>
    %18 = arith.maximumf %16, %17 : vector<32x128xf32>
    %19 = arith.truncf %18 : vector<32x128xf32> to vector<32x128xbf16>
    %c0_12 = arith.constant 0 : index
    %c0_13 = arith.constant 0 : index
    %20 = vector.load %arg8[%c0_12, %c0_13] : memref<128x128xbf16, #tpu.memory_space<vmem>>, vector<128x128xbf16>
    %cst_14 = arith.constant dense<0.000000e+00> : vector<32x128xf32>
    %21 = tpu.matmul %11, %20, %cst_14 {dimension_numbers = #tpu.dot_dimension_numbers<[1], [0], [0], [1], [0, 0, 1, 1], [], []>} : vector<32x128xbf16>, vector<128x128xbf16>, vector<32x128xf32> -> vector<32x128xf32>
    %c0_15 = arith.constant 0 : index
    %c0_16 = arith.constant 0 : index
    %22 = vector.load %arg9[%c0_15, %c0_16] : memref<1x128xf32, #tpu.memory_space<vmem>>, vector<1x128xf32>
    %23 = vector.broadcast %22 : vector<1x128xf32> to vector<32x128xf32>
    %24 = arith.addf %21, %23 : vector<32x128xf32>
    %cst_17 = arith.constant 0.000000e+00 : f32
    %25 = vector.broadcast %cst_17 : f32 to vector<32x128xf32>
    %26 = arith.maximumf %24, %25 : vector<32x128xf32>
    %27 = arith.truncf %26 : vector<32x128xf32> to vector<32x128xbf16>
    %c0_18 = arith.constant 0 : index
    %c0_19 = arith.constant 0 : index
    %28 = vector.load %arg6[%c0_18, %c0_19] : memref<128x128xbf16, #tpu.memory_space<vmem>>, vector<128x128xbf16>
    %cst_20 = arith.constant dense<0.000000e+00> : vector<32x128xf32>
    %29 = tpu.matmul %19, %28, %cst_20 {dimension_numbers = #tpu.dot_dimension_numbers<[1], [0], [0], [1], [0, 0, 1, 1], [], []>} : vector<32x128xbf16>, vector<128x128xbf16>, vector<32x128xf32> -> vector<32x128xf32>
    %c0_21 = arith.constant 0 : index
    %c0_22 = arith.constant 0 : index
    %30 = vector.load %arg7[%c0_21, %c0_22] : memref<1x128xf32, #tpu.memory_space<vmem>>, vector<1x128xf32>
    %31 = vector.broadcast %30 : vector<1x128xf32> to vector<32x128xf32>
    %32 = arith.addf %29, %31 : vector<32x128xf32>
    %cst_23 = arith.constant 0.000000e+00 : f32
    %33 = vector.broadcast %cst_23 : f32 to vector<32x128xf32>
    %34 = arith.maximumf %32, %33 : vector<32x128xf32>
    %35 = arith.truncf %34 : vector<32x128xf32> to vector<32x128xbf16>
    %c0_24 = arith.constant 0 : index
    %c0_25 = arith.constant 0 : index
    %36 = vector.load %arg10[%c0_24, %c0_25] : memref<128x128xbf16, #tpu.memory_space<vmem>>, vector<128x128xbf16>
    %cst_26 = arith.constant dense<0.000000e+00> : vector<32x128xf32>
    %37 = tpu.matmul %27, %36, %cst_26 {dimension_numbers = #tpu.dot_dimension_numbers<[1], [0], [0], [1], [0, 0, 1, 1], [], []>} : vector<32x128xbf16>, vector<128x128xbf16>, vector<32x128xf32> -> vector<32x128xf32>
    %c0_27 = arith.constant 0 : index
    %c0_28 = arith.constant 0 : index
    %38 = vector.load %arg11[%c0_27, %c0_28] : memref<1x128xf32, #tpu.memory_space<vmem>>, vector<1x128xf32>
    %39 = vector.broadcast %38 : vector<1x128xf32> to vector<32x128xf32>
    %40 = arith.addf %37, %39 : vector<32x128xf32>
    %cst_29 = arith.constant 0.000000e+00 : f32
    %41 = vector.broadcast %cst_29 : f32 to vector<32x128xf32>
    %42 = arith.maximumf %40, %41 : vector<32x128xf32>
    %43 = arith.truncf %42 : vector<32x128xf32> to vector<32x128xbf16>
    %44 = tpu.concatenate %35, %43 in 1 : vector<32x128xbf16>, vector<32x128xbf16> -> vector<32x256xbf16>
    %c0_30 = arith.constant 0 : index
    %c0_31 = arith.constant 0 : index
    %45 = vector.load %arg12[%c0_30, %c0_31] : memref<256x128xbf16, #tpu.memory_space<vmem>>, vector<256x128xbf16>
    %cst_32 = arith.constant dense<0.000000e+00> : vector<32x128xf32>
    %46 = tpu.matmul %44, %45, %cst_32 {dimension_numbers = #tpu.dot_dimension_numbers<[1], [0], [0], [1], [0, 0, 1, 1], [], []>} : vector<32x256xbf16>, vector<256x128xbf16>, vector<32x128xf32> -> vector<32x128xf32>
    %c0_33 = arith.constant 0 : index
    %c0_34 = arith.constant 0 : index
    %47 = vector.load %arg13[%c0_33, %c0_34] : memref<1x128xf32, #tpu.memory_space<vmem>>, vector<1x128xf32>
    %48 = vector.broadcast %47 : vector<1x128xf32> to vector<32x128xf32>
    %49 = arith.addf %46, %48 : vector<32x128xf32>
    %c0_35 = arith.constant 0 : index
    %c0_36 = arith.constant 0 : index
    %50 = vector.load %arg14[%c0_35, %c0_36] : memref<32x128xf32, #tpu.memory_space<vmem>>, vector<32x128xf32>
    tpu.vector_store %arg14[%c0_35, %c0_36], %49 {strides = array<i32>} : memref<32x128xf32, #tpu.memory_space<vmem>>, vector<32x128xf32>,
    return
  }
  func.func @transform_0(%arg0: i32) -> (i32, i32) {
    %c0_i32 = arith.constant 0 : i32
    %c0_i32_0 = arith.constant 0 : i32
    return %arg0, %c0_i32 : i32, i32
  }
  func.func @transform_1(%arg0: i32) -> (i32, i32) {
    %c0_i32 = arith.constant 0 : i32
    %c0_i32_0 = arith.constant 0 : i32
    %c0_i32_1 = arith.constant 0 : i32
    return %c0_i32, %c0_i32_0 : i32, i32
  }
  func.func @transform_2(%arg0: i32) -> (i32, i32) {
    %c0_i32 = arith.constant 0 : i32
    %c0_i32_0 = arith.constant 0 : i32
    %c0_i32_1 = arith.constant 0 : i32
    return %c0_i32, %c0_i32_0 : i32, i32
  }
  func.func @transform_3(%arg0: i32) -> (i32, i32) {
    %c0_i32 = arith.constant 0 : i32
    %c0_i32_0 = arith.constant 0 : i32
    %c0_i32_1 = arith.constant 0 : i32
    return %c0_i32, %c0_i32_0 : i32, i32
  }
  func.func @transform_4(%arg0: i32) -> (i32, i32) {
    %c0_i32 = arith.constant 0 : i32
    %c0_i32_0 = arith.constant 0 : i32
    %c0_i32_1 = arith.constant 0 : i32
    return %c0_i32, %c0_i32_0 : i32, i32
  }
  func.func @transform_5(%arg0: i32) -> (i32, i32) {
    %c0_i32 = arith.constant 0 : i32
    %c0_i32_0 = arith.constant 0 : i32
    %c0_i32_1 = arith.constant 0 : i32
    return %c0_i32, %c0_i32_0 : i32, i32
  }
  func.func @transform_6(%arg0: i32) -> (i32, i32) {
    %c0_i32 = arith.constant 0 : i32
    %c0_i32_0 = arith.constant 0 : i32
    %c0_i32_1 = arith.constant 0 : i32
    return %c0_i32, %c0_i32_0 : i32, i32
  }
  func.func @transform_7(%arg0: i32) -> (i32, i32) {
    %c0_i32 = arith.constant 0 : i32
    %c0_i32_0 = arith.constant 0 : i32
    %c0_i32_1 = arith.constant 0 : i32
    return %c0_i32, %c0_i32_0 : i32, i32
  }
  func.func @transform_8(%arg0: i32) -> (i32, i32) {
    %c0_i32 = arith.constant 0 : i32
    %c0_i32_0 = arith.constant 0 : i32
    %c0_i32_1 = arith.constant 0 : i32
    return %c0_i32, %c0_i32_0 : i32, i32
  }
  func.func @transform_9(%arg0: i32) -> (i32, i32) {
    %c0_i32 = arith.constant 0 : i32
    %c0_i32_0 = arith.constant 0 : i32
    %c0_i32_1 = arith.constant 0 : i32
    return %c0_i32, %c0_i32_0 : i32, i32
  }
  func.func @transform_10(%arg0: i32) -> (i32, i32) {
    %c0_i32 = arith.constant 0 : i32
    %c0_i32_0 = arith.constant 0 : i32
    %c0_i32_1 = arith.constant 0 : i32
    return %c0_i32, %c0_i32_0 : i32, i32
  }
  func.func @transform_11(%arg0: i32) -> (i32, i32) {
    %c0_i32 = arith.constant 0 : i32
    %c0_i32_0 = arith.constant 0 : i32
    %c0_i32_1 = arith.constant 0 : i32
    return %c0_i32, %c0_i32_0 : i32, i32
  }
  func.func @transform_12(%arg0: i32) -> (i32, i32) {
    %c0_i32 = arith.constant 0 : i32
    %c0_i32_0 = arith.constant 0 : i32
    %c0_i32_1 = arith.constant 0 : i32
    return %c0_i32, %c0_i32_0 : i32, i32
  }
  func.func @transform_13(%arg0: i32) -> (i32, i32) {
    %c0_i32 = arith.constant 0 : i32
    %c0_i32_0 = arith.constant 0 : i32
    return %arg0, %c0_i32 : i32, i32
  }
}

</mosaic_0001>

<llo_original>
// kernel: tpu_custom_call.1
$region0: #{tpu_custom_call.1}
  #allocation0 [shape = 'u32[]', space=smem, size = 0x4, offset = 0x4, fixed_abs, tag = 'smem constant byte address 0x4 - core index']
  #allocation1 [shape = 'u32[144,128]{1,0:T(1,128)}', space=vmem, size = 0x12000, scoped, tag = 'internal scratch']
  %s0 = inlined_call_operand.vmem [shape: f32[64,16], index: 0, kind: input, shape index: {}]
  %s1 = inlined_call_operand.vmem [shape: bf16[16,256], index: 1, kind: input, shape index: {}]
  %s2 = inlined_call_operand.vmem [shape: f32[1,256], index: 2, kind: input, shape index: {}]
  %s3 = inlined_call_operand.vmem [shape: bf16[128,128], index: 3, kind: input, shape index: {}]
  %s4 = inlined_call_operand.vmem [shape: f32[1,128], index: 4, kind: input, shape index: {}]
  %s5 = inlined_call_operand.hbm [shape: bf16[128,128], index: 5, kind: input, shape index: {}]
  %s6 = inlined_call_operand.vmem [shape: f32[1,128], index: 6, kind: input, shape index: {}]
  %s7 = inlined_call_operand.hbm [shape: bf16[128,128], index: 7, kind: input, shape index: {}]
  %s8 = inlined_call_operand.vmem [shape: f32[1,128], index: 8, kind: input, shape index: {}]
  %s9 = inlined_call_operand.hbm [shape: bf16[128,128], index: 9, kind: input, shape index: {}]
  %s10 = inlined_call_operand.vmem [shape: f32[1,128], index: 10, kind: input, shape index: {}]
  %s11 = inlined_call_operand.hbm [shape: bf16[256,128], index: 11, kind: input, shape index: {}]
  %s12 = inlined_call_operand.vmem [shape: f32[1,128], index: 12, kind: input, shape index: {}]
  %s13 = inlined_call_operand.hbm [shape: f32[64,128], index: 13, kind: output, shape index: {}]
  %s14 = sld [smem:[#allocation0]]
  $region101: #{tpu_custom_call.1} parent=0
    _
  %s16 = ssub.s32 1, %s14
  %s17 = scalar_select 0, %s16, %s14
  $region1: #{tpu_custom_call.1} parent=0
    #allocation2 [shape = 'u8[32768]{0}', space=vmem, size = 0x8000, scoped, tag = 'input window, operand 5, single buffered']
    #allocation3 [shape = 's32[2]{0}', space=sflag, size = 0x8, scoped, tag = 'scoped memory for tpu_custom_call.1']
    #allocation4 [shape = 's32[2]{0}', space=sflag, size = 0x8, scoped, tag = 'scoped memory for tpu_custom_call.1']
    #allocation5 [shape = 'u8[32768]{0}', space=vmem, size = 0x8000, scoped, tag = 'input window, operand 7, single buffered']
    #allocation6 [shape = 's32[1]{0}', space=sflag, size = 0x4, scoped, tag = 'scoped memory for tpu_custom_call.1']
    #allocation7 [shape = 'u8[32768]{0}', space=vmem, size = 0x8000, scoped, tag = 'input window, operand 9, single buffered']
    #allocation8 [shape = 'u8[65536]{0}', space=vmem, size = 0x10000, scoped, tag = 'input window, operand 11, single buffered']
    #allocation9 [shape = 's32[1]{0}', space=sflag, size = 0x4, scoped, tag = 'scoped memory for tpu_custom_call.1']
    #allocation10 [shape = 'u8[32768]{0}', space=vmem, size = 0x8000, scoped, tag = 'output window, operand 0']
    %18 = vsyncpa [#allocation3], 0
    %19 = vsyncpa [#allocation6], 0
    %20 = vsyncpa [#allocation9], 0
    %21 = vsyncpa [#allocation4], 0
    %s22 = scalar_lea.sflag [#allocation4], 1
    %23 = vsyncpa %s22, 0
    loop: start=0, step=1, limit=4
    $region2: #{tpu_custom_call.1} parent=1 // loop_pre_header
      _
    $region3: #{tpu_custom_call.1} parent=1 // loop_header
      %s25 = sphi 0, %s29
      %p26 = scmp.ge.s32.totalorder %s25, 4
      %s35 = sphi 0, %s37
      %s38 = sphi 0, %s35
      %s39 = sphi 0, %s38
      %s55 = sphi 0, %s39
      %s59 = sphi 0, %s59
      %s61 = sphi 0, %s59
      %s62 = sphi 0, %s61
      %s76 = sphi 0, %s62
      %s80 = sphi 0, %s80
      %s82 = sphi 0, %s80
      %s83 = sphi 0, %s82
      %s97 = sphi 0, %s83
      %s101 = sphi 0, %s101
      %s103 = sphi 0, %s101
      %s104 = sphi 0, %s103
      %s118 = sphi 0, %s104
      %s122 = sphi 0, %s122
      %s124 = sphi 0, %s122
      %s125 = sphi 0, %s124
      %s139 = sphi 0, %s125
      %s143 = sphi 0, %s143
      %s145 = sphi 0, %s143
      %s146 = sphi 0, %s145
      %s160 = sphi 0, %s146
      %s164 = sphi 0, %s164
      %s166 = sphi 0, %s164
      %s167 = sphi 0, %s166
      %s181 = sphi 0, %s167
      %s185 = sphi 0, %s185
      %s187 = sphi 0, %s185
      %s188 = sphi 0, %s187
      %s202 = sphi 0, %s188
      %s206 = sphi 0, %s206
      %s208 = sphi 0, %s206
      %s209 = sphi 0, %s208
      %s223 = sphi 0, %s209
      %s227 = sphi 0, %s227
      %s229 = sphi 0, %s227
      %s230 = sphi 0, %s229
      %s244 = sphi 0, %s230
      %s248 = sphi 0, %s248
      %s250 = sphi 0, %s248
      %s251 = sphi 0, %s250
      %s265 = sphi 0, %s251
      %s269 = sphi 0, %s269
      %s271 = sphi 0, %s269
      %s272 = sphi 0, %s271
      %s286 = sphi 0, %s272
      %s290 = sphi 0, %s290
      %s292 = sphi 0, %s290
      %s293 = sphi 0, %s292
      %s307 = sphi 0, %s293
      %s313 = sphi 0, %s315
      %s316 = sphi 0, %s313
      %s317 = sphi 0, %s316
      %s333 = sphi 0, %s317
    $region4: #{tpu_custom_call.1} parent=1 // loop_header_branch
      %28 = sbr.rel (%p26) target = $region8
    $region5: #{tpu_custom_call.1} parent=1 // loop_body
      %s30 = ssub.s32 %s25, 1
      %s31 = ssub.s32 %s25, 2
      %s32 = sadd.s32 %s25, 1
      %s33 = ssub.s32 %s25, %s32
      %p34 = scmp.eq.s32.totalorder %s33, 0
      %s36 = sadd.s32 %s35, 1
      %s37 = scalar_select %p34, %s35, %s36
      %p40 = pneg %p34
      %p41 = scmp.eq.s32.totalorder %s25, 1
      %p42 = por %p40, %p41
      %p43 = scmp.ne.s32.totalorder %s35, %s38
      %p44 = scmp.eq.s32.totalorder %s25, 0
      %p45 = por %p43, %p44
      %p46 = scmp.ne.s32.totalorder %s35, %s38
      %p47 = scmp.eq.s32.totalorder %s30, 1
      %p48 = por %p46, %p47
      %p49 = scmp.ne.s32.totalorder %s38, %s39
      %p50 = scmp.eq.s32.totalorder %s30, 0
      %p51 = por %p49, %p50
      %p52 = scmp.ne.s32.totalorder %s38, %s39
      %p53 = scmp.eq.s32.totalorder %s31, 1
      %p54 = por %p52, %p53
      %p56 = scmp.ne.s32.totalorder %s39, %s55
      %p57 = scmp.eq.s32.totalorder %s31, 0
      %p58 = por %p56, %p57
      %s60 = sadd.s32 %s59, 1
      %p63 = scmp.eq.s32.totalorder %s25, 1
      %p64 = scmp.ne.s32.totalorder %s59, %s61
      %p65 = scmp.eq.s32.totalorder %s25, 0
      %p66 = por %p64, %p65
      %p67 = scmp.ne.s32.totalorder %s59, %s61
      %p68 = scmp.eq.s32.totalorder %s30, 1
      %p69 = por %p67, %p68
      %p70 = scmp.ne.s32.totalorder %s61, %s62
      %p71 = scmp.eq.s32.totalorder %s30, 0
      %p72 = por %p70, %p71
      %p73 = scmp.ne.s32.totalorder %s61, %s62
      %p74 = scmp.eq.s32.totalorder %s31, 1
      %p75 = por %p73, %p74
      %p77 = scmp.ne.s32.totalorder %s62, %s76
      %p78 = scmp.eq.s32.totalorder %s31, 0
      %p79 = por %p77, %p78
      %s81 = sadd.s32 %s80, 1
      %p84 = scmp.eq.s32.totalorder %s25, 1
      %p85 = scmp.ne.s32.totalorder %s80, %s82
      %p86 = scmp.eq.s32.totalorder %s25, 0
      %p87 = por %p85, %p86
      %p88 = scmp.ne.s32.totalorder %s80, %s82
      %p89 = scmp.eq.s32.totalorder %s30, 1
      %p90 = por %p88, %p89
      %p91 = scmp.ne.s32.totalorder %s82, %s83
      %p92 = scmp.eq.s32.totalorder %s30, 0
      %p93 = por %p91, %p92
      %p94 = scmp.ne.s32.totalorder %s82, %s83
      %p95 = scmp.eq.s32.totalorder %s31, 1
      %p96 = por %p94, %p95
      %p98 = scmp.ne.s32.totalorder %s83, %s97
      %p99 = scmp.eq.s32.totalorder %s31, 0
      %p100 = por %p98, %p99
      %s102 = sadd.s32 %s101, 1
      %p105 = scmp.eq.s32.totalorder %s25, 1
      %p106 = scmp.ne.s32.totalorder %s101, %s103
      %p107 = scmp.eq.s32.totalorder %s25, 0
      %p108 = por %p106, %p107
      %p109 = scmp.ne.s32.totalorder %s101, %s103
      %p110 = scmp.eq.s32.totalorder %s30, 1
      %p111 = por %p109, %p110
      %p112 = scmp.ne.s32.totalorder %s103, %s104
      %p113 = scmp.eq.s32.totalorder %s30, 0
      %p114 = por %p112, %p113
      %p115 = scmp.ne.s32.totalorder %s103, %s104
      %p116 = scmp.eq.s32.totalorder %s31, 1
      %p117 = por %p115, %p116
      %p119 = scmp.ne.s32.totalorder %s104, %s118
      %p120 = scmp.eq.s32.totalorder %s31, 0
      %p121 = por %p119, %p120
      %s123 = sadd.s32 %s122, 1
      %p126 = scmp.eq.s32.totalorder %s25, 1
      %p127 = scmp.ne.s32.totalorder %s122, %s124
      %p128 = scmp.eq.s32.totalorder %s25, 0
      %p129 = por %p127, %p128
      %p130 = scmp.ne.s32.totalorder %s122, %s124
      %p131 = scmp.eq.s32.totalorder %s30, 1
      %p132 = por %p130, %p131
      %p133 = scmp.ne.s32.totalorder %s124, %s125
      %p134 = scmp.eq.s32.totalorder %s30, 0
      %p135 = por %p133, %p134
      %p136 = scmp.ne.s32.totalorder %s124, %s125
      %p137 = scmp.eq.s32.totalorder %s31, 1
      %p138 = por %p136, %p137
      %p140 = scmp.ne.s32.totalorder %s125, %s139
      %p141 = scmp.eq.s32.totalorder %s31, 0
      %p142 = por %p140, %p141
      %s144 = sadd.s32 %s143, 1
      %p147 = scmp.eq.s32.totalorder %s25, 1
      %p148 = scmp.ne.s32.totalorder %s143, %s145
      %p149 = scmp.eq.s32.totalorder %s25, 0
      %p150 = por %p148, %p149
      %p151 = scmp.ne.s32.totalorder %s143, %s145
      %p152 = scmp.eq.s32.totalorder %s30, 1
      %p153 = por %p151, %p152
      %p154 = scmp.ne.s32.totalorder %s145, %s146
      %p155 = scmp.eq.s32.totalorder %s30, 0
      %p156 = por %p154, %p155
      %p157 = scmp.ne.s32.totalorder %s145, %s146
      %p158 = scmp.eq.s32.totalorder %s31, 1
      %p159 = por %p157, %p158
      %p161 = scmp.ne.s32.totalorder %s146, %s160
      %p162 = scmp.eq.s32.totalorder %s31, 0
      %p163 = por %p161, %p162
      %s165 = sadd.s32 %s164, 1
      %p168 = scmp.eq.s32.totalorder %s25, 1
      %p169 = scmp.ne.s32.totalorder %s164, %s166
      %p170 = scmp.eq.s32.totalorder %s25, 0
      %p171 = por %p169, %p170
      %p172 = scmp.ne.s32.totalorder %s164, %s166
      %p173 = scmp.eq.s32.totalorder %s30, 1
      %p174 = por %p172, %p173
      %p175 = scmp.ne.s32.totalorder %s166, %s167
      %p176 = scmp.eq.s32.totalorder %s30, 0
      %p177 = por %p175, %p176
      %p178 = scmp.ne.s32.totalorder %s166, %s167
      %p179 = scmp.eq.s32.totalorder %s31, 1
      %p180 = por %p178, %p179
      %p182 = scmp.ne.s32.totalorder %s167, %s181
      %p183 = scmp.eq.s32.totalorder %s31, 0
      %p184 = por %p182, %p183
      %s186 = sadd.s32 %s185, 1
      %p189 = scmp.eq.s32.totalorder %s25, 1
      %p190 = scmp.ne.s32.totalorder %s185, %s187
      %p191 = scmp.eq.s32.totalorder %s25, 0
      %p192 = por %p190, %p191
      %p193 = scmp.ne.s32.totalorder %s185, %s187
      %p194 = scmp.eq.s32.totalorder %s30, 1
      %p195 = por %p193, %p194
      %p196 = scmp.ne.s32.totalorder %s187, %s188
      %p197 = scmp.eq.s32.totalorder %s30, 0
      %p198 = por %p196, %p197
      %p199 = scmp.ne.s32.totalorder %s187, %s188
      %p200 = scmp.eq.s32.totalorder %s31, 1
      %p201 = por %p199, %p200
      %p203 = scmp.ne.s32.totalorder %s188, %s202
      %p204 = scmp.eq.s32.totalorder %s31, 0
      %p205 = por %p203, %p204
      %s207 = sadd.s32 %s206, 1
      %p210 = scmp.eq.s32.totalorder %s25, 1
      %p211 = scmp.ne.s32.totalorder %s206, %s208
      %p212 = scmp.eq.s32.totalorder %s25, 0
      %p213 = por %p211, %p212
      %p214 = scmp.ne.s32.totalorder %s206, %s208
      %p215 = scmp.eq.s32.totalorder %s30, 1
      %p216 = por %p214, %p215
      %p217 = scmp.ne.s32.totalorder %s208, %s209
      %p218 = scmp.eq.s32.totalorder %s30, 0
      %p219 = por %p217, %p218
      %p220 = scmp.ne.s32.totalorder %s208, %s209
      %p221 = scmp.eq.s32.totalorder %s31, 1
      %p222 = por %p220, %p221
      %p224 = scmp.ne.s32.totalorder %s209, %s223
      %p225 = scmp.eq.s32.totalorder %s31, 0
      %p226 = por %p224, %p225
      %s228 = sadd.s32 %s227, 1
      %p231 = scmp.eq.s32.totalorder %s25, 1
      %p232 = scmp.ne.s32.totalorder %s227, %s229
      %p233 = scmp.eq.s32.totalorder %s25, 0
      %p234 = por %p232, %p233
      %p235 = scmp.ne.s32.totalorder %s227, %s229
      %p236 = scmp.eq.s32.totalorder %s30, 1
      %p237 = por %p235, %p236
      %p238 = scmp.ne.s32.totalorder %s229, %s230
      %p239 = scmp.eq.s32.totalorder %s30, 0
      %p240 = por %p238, %p239
      %p241 = scmp.ne.s32.totalorder %s229, %s230
      %p242 = scmp.eq.s32.totalorder %s31, 1
      %p243 = por %p241, %p242
      %p245 = scmp.ne.s32.totalorder %s230, %s244
      %p246 = scmp.eq.s32.totalorder %s31, 0
      %p247 = por %p245, %p246
      %s249 = sadd.s32 %s248, 1
      %p252 = scmp.eq.s32.totalorder %s25, 1
      %p253 = scmp.ne.s32.totalorder %s248, %s250
      %p254 = scmp.eq.s32.totalorder %s25, 0
      %p255 = por %p253, %p254
      %p256 = scmp.ne.s32.totalorder %s248, %s250
      %p257 = scmp.eq.s32.totalorder %s30, 1
      %p258 = por %p256, %p257
      %p259 = scmp.ne.s32.totalorder %s250, %s251
      %p260 = scmp.eq.s32.totalorder %s30, 0
      %p261 = por %p259, %p260
      %p262 = scmp.ne.s32.totalorder %s250, %s251
      %p263 = scmp.eq.s32.totalorder %s31, 1
      %p264 = por %p262, %p263
      %p266 = scmp.ne.s32.totalorder %s251, %s265
      %p267 = scmp.eq.s32.totalorder %s31, 0
      %p268 = por %p266, %p267
      %s270 = sadd.s32 %s269, 1
      %p273 = scmp.eq.s32.totalorder %s25, 1
      %p274 = scmp.ne.s32.totalorder %s269, %s271
      %p275 = scmp.eq.s32.totalorder %s25, 0
      %p276 = por %p274, %p275
      %p277 = scmp.ne.s32.totalorder %s269, %s271
      %p278 = scmp.eq.s32.totalorder %s30, 1
      %p279 = por %p277, %p278
      %p280 = scmp.ne.s32.totalorder %s271, %s272
      %p281 = scmp.eq.s32.totalorder %s30, 0
      %p282 = por %p280, %p281
      %p283 = scmp.ne.s32.totalorder %s271, %s272
      %p284 = scmp.eq.s32.totalorder %s31, 1
      %p285 = por %p283, %p284
      %p287 = scmp.ne.s32.totalorder %s272, %s286
      %p288 = scmp.eq.s32.totalorder %s31, 0
      %p289 = por %p287, %p288
      %s291 = sadd.s32 %s290, 1
      %p294 = scmp.eq.s32.totalorder %s25, 1
      %p295 = scmp.ne.s32.totalorder %s290, %s292
      %p296 = scmp.eq.s32.totalorder %s25, 0
      %p297 = por %p295, %p296
      %p298 = scmp.ne.s32.totalorder %s290, %s292
      %p299 = scmp.eq.s32.totalorder %s30, 1
      %p300 = por %p298, %p299
      %p301 = scmp.ne.s32.totalorder %s292, %s293
      %p302 = scmp.eq.s32.totalorder %s30, 0
      %p303 = por %p301, %p302
      %p304 = scmp.ne.s32.totalorder %s292, %s293
      %p305 = scmp.eq.s32.totalorder %s31, 1
      %p306 = por %p304, %p305
      %p308 = scmp.ne.s32.totalorder %s293, %s307
      %p309 = scmp.eq.s32.totalorder %s31, 0
      %p310 = por %p308, %p309
      %s311 = ssub.s32 %s25, %s32
      %p312 = scmp.eq.s32.totalorder %s311, 0
      %s314 = sadd.s32 %s313, 1
      %s315 = scalar_select %p312, %s313, %s314
      %p318 = pneg %p312
      %p319 = scmp.eq.s32.totalorder %s25, 1
      %p320 = por %p318, %p319
      %p321 = scmp.ne.s32.totalorder %s313, %s316
      %p322 = scmp.eq.s32.totalorder %s25, 0
      %p323 = por %p321, %p322
      %p324 = scmp.ne.s32.totalorder %s313, %s316
      %p325 = scmp.eq.s32.totalorder %s30, 1
      %p326 = por %p324, %p325
      %p327 = scmp.ne.s32.totalorder %s316, %s317
      %p328 = scmp.eq.s32.totalorder %s30, 0
      %p329 = por %p327, %p328
      %p330 = scmp.ne.s32.totalorder %s316, %s317
      %p331 = scmp.eq.s32.totalorder %s31, 1
      %p332 = por %p330, %p331
      %p334 = scmp.ne.s32.totalorder %s317, %s333
      %p335 = scmp.eq.s32.totalorder %s31, 0
      %p336 = por %p334, %p335
      %p337 = scmp.le.s32.totalorder 1, %s25
      %p338 = scmp.lt.s32.totalorder %s25, 3
      %p339 = pnand %p337, %p338
      %p340 = pneg %p339
      // Predicated region
      $region9: #{tpu_custom_call.1} parent=5 // pred_check
        _
      $region10: #{tpu_custom_call.1} parent=5 // pred_check_branch
        %342 = sbr.rel (%p339) target = $region12
      $region11: #{tpu_custom_call.1} parent=5 // pred_region
        %s343 = ssub.s32 %s25, 1
        // Predicated region
        $region13: #{tpu_custom_call.1} parent=11 // pred_check
          %p344 = pneg %p72
        $region14: #{tpu_custom_call.1} parent=11 // pred_check_branch
          %346 = sbr.rel (%p344) target = $region16
        $region15: #{tpu_custom_call.1} parent=11 // pred_region
          _
        $region16: #{tpu_custom_call.1} parent=11 // pred_fallthru
          _
        // Predicated region
        $region17: #{tpu_custom_call.1} parent=11 // pred_check
          %p347 = pneg %p93
        $region18: #{tpu_custom_call.1} parent=11 // pred_check_branch
          %349 = sbr.rel (%p347) target = $region20
        $region19: #{tpu_custom_call.1} parent=11 // pred_region
          _
        $region20: #{tpu_custom_call.1} parent=11 // pred_fallthru
          _
        // Predicated region
        $region21: #{tpu_custom_call.1} parent=11 // pred_check
          %p350 = pneg %p114
        $region22: #{tpu_custom_call.1} parent=11 // pred_check_branch
          %352 = sbr.rel (%p350) target = $region24
        $region23: #{tpu_custom_call.1} parent=11 // pred_region
          _
        $region24: #{tpu_custom_call.1} parent=11 // pred_fallthru
          _
        // Predicated region
        $region25: #{tpu_custom_call.1} parent=11 // pred_check
          %p353 = pneg %p135
        $region26: #{tpu_custom_call.1} parent=11 // pred_check_branch
          %355 = sbr.rel (%p353) target = $region28
        $region27: #{tpu_custom_call.1} parent=11 // pred_region
          _
        $region28: #{tpu_custom_call.1} parent=11 // pred_fallthru
          _
        // Predicated region
        $region29: #{tpu_custom_call.1} parent=11 // pred_check
          %p356 = pneg %p156
        $region30: #{tpu_custom_call.1} parent=11 // pred_check_branch
          %358 = sbr.rel (%p356) target = $region32
        $region31: #{tpu_custom_call.1} parent=11 // pred_region
          %s360 = ssub.s32 1024, 1024
          %361 = vsyncadd [#allocation3], %s360
          %s362 = sshll.u32 [#allocation2], 4
          %s363 = int_to_ptr.vmem [resolvable:$true] %s362
          %368 = dma.hbm_to_vmem [thread:$0]  %s5, 1024, %s363, [#allocation3], 64, 64, 4
        $region32: #{tpu_custom_call.1} parent=11 // pred_fallthru
          _
        // Predicated region
        $region33: #{tpu_custom_call.1} parent=11 // pred_check
          %p369 = pneg %p177
        $region34: #{tpu_custom_call.1} parent=11 // pred_check_branch
          %371 = sbr.rel (%p369) target = $region36
        $region35: #{tpu_custom_call.1} parent=11 // pred_region
          _
        $region36: #{tpu_custom_call.1} parent=11 // pred_fallthru
          _
        // Predicated region
        $region37: #{tpu_custom_call.1} parent=11 // pred_check
          %p372 = pneg %p198
        $region38: #{tpu_custom_call.1} parent=11 // pred_check_branch
          %374 = sbr.rel (%p372) target = $region40
        $region39: #{tpu_custom_call.1} parent=11 // pred_region
          %s376 = ssub.s32 1024, 1024
          %377 = vsyncadd [#allocation6], %s376
          %s378 = sshll.u32 [#allocation5], 4
          %s379 = int_to_ptr.vmem [resolvable:$true] %s378
          %384 = dma.hbm_to_vmem [thread:$0]  %s7, 1024, %s379, [#allocation6], 64, 64, 4
        $region40: #{tpu_custom_call.1} parent=11 // pred_fallthru
          _
        // Predicated region
        $region41: #{tpu_custom_call.1} parent=11 // pred_check
          %p385 = pneg %p219
        $region42: #{tpu_custom_call.1} parent=11 // pred_check_branch
          %387 = sbr.rel (%p385) target = $region44
        $region43: #{tpu_custom_call.1} parent=11 // pred_region
          _
        $region44: #{tpu_custom_call.1} parent=11 // pred_fallthru
          _
        // Predicated region
        $region45: #{tpu_custom_call.1} parent=11 // pred_check
          %p388 = pneg %p240
        $region46: #{tpu_custom_call.1} parent=11 // pred_check_branch
          %390 = sbr.rel (%p388) target = $region48
        $region47: #{tpu_custom_call.1} parent=11 // pred_region
          %s392 = ssub.s32 1024, 1024
          %393 = vsyncadd [#allocation6], %s392
          %s394 = sshll.u32 [#allocation7], 4
          %s395 = int_to_ptr.vmem [resolvable:$true] %s394
          %400 = dma.hbm_to_vmem [thread:$0]  %s9, 1024, %s395, [#allocation6], 64, 64, 4
        $region48: #{tpu_custom_call.1} parent=11 // pred_fallthru
          _
        // Predicated region
        $region49: #{tpu_custom_call.1} parent=11 // pred_check
          %p401 = pneg %p261
        $region50: #{tpu_custom_call.1} parent=11 // pred_check_branch
          %403 = sbr.rel (%p401) target = $region52
        $region51: #{tpu_custom_call.1} parent=11 // pred_region
          _
        $region52: #{tpu_custom_call.1} parent=11 // pred_fallthru
          _
        // Predicated region
        $region53: #{tpu_custom_call.1} parent=11 // pred_check
          %p404 = pneg %p282
        $region54: #{tpu_custom_call.1} parent=11 // pred_check_branch
          %406 = sbr.rel (%p404) target = $region56
        $region55: #{tpu_custom_call.1} parent=11 // pred_region
          %s408 = ssub.s32 2048, 2048
          %409 = vsyncadd [#allocation9], %s408
          %s410 = sshll.u32 [#allocation8], 4
          %s411 = int_to_ptr.vmem [resolvable:$true] %s410
          %416 = dma.hbm_to_vmem [thread:$0]  %s11, 2048, %s411, [#allocation9], 64, 64, 4
        $region56: #{tpu_custom_call.1} parent=11 // pred_fallthru
          _
        // Predicated region
        $region57: #{tpu_custom_call.1} parent=11 // pred_check
          %p417 = pneg %p303
        $region58: #{tpu_custom_call.1} parent=11 // pred_check_branch
          %419 = sbr.rel (%p417) target = $region60
        $region59: #{tpu_custom_call.1} parent=11 // pred_region
          _
        $region60: #{tpu_custom_call.1} parent=11 // pred_fallthru
          _
      $region12: #{tpu_custom_call.1} parent=5 // pred_fallthru
        _
      %p420 = scmp.lt.s32.totalorder %s25, 2
      // Predicated region
      $region61: #{tpu_custom_call.1} parent=5 // pred_check
        %p421 = pneg %p420
      $region62: #{tpu_custom_call.1} parent=5 // pred_check_branch
        %423 = sbr.rel (%p421) target = $region64
      $region63: #{tpu_custom_call.1} parent=5 // pred_region
        // Predicated region
        $region65: #{tpu_custom_call.1} parent=63 // pred_check
          %p424 = pneg %p45
        $region66: #{tpu_custom_call.1} parent=63 // pred_check_branch
          %426 = sbr.rel (%p424) target = $region68
        $region67: #{tpu_custom_call.1} parent=63 // pred_region
          %s427 = smul.u32 4, %s25
          %p428 = scmp.lt.s32.totalorder %s427, 7
          %s429 = scalar_select %p428, %s427, 7
          %s430 = smul.addr %s429, 8
          %s431 = scalar_lea.vmem %s0, %s430
          %s432 = smul.u32 4, %s25
        $region68: #{tpu_custom_call.1} parent=63 // pred_fallthru
          _
      $region64: #{tpu_custom_call.1} parent=5 // pred_fallthru
        _
      %p433 = scmp.le.s32.totalorder 1, %s25
      %p434 = scmp.lt.s32.totalorder %s25, 3
      %p435 = pnand %p433, %p434
      %p436 = pneg %p435
      // Predicated region
      $region69: #{tpu_custom_call.1} parent=5 // pred_check
        _
      $region70: #{tpu_custom_call.1} parent=5 // pred_check_branch
        %438 = sbr.rel (%p435) target = $region72
      $region71: #{tpu_custom_call.1} parent=5 // pred_region
        %s439 = ssub.s32 %s25, 1
        // Predicated region
        $region73: #{tpu_custom_call.1} parent=71 // pred_check
          %p440 = pneg %p156
        $region74: #{tpu_custom_call.1} parent=71 // pred_check_branch
          %442 = sbr.rel (%p440) target = $region76
        $region75: #{tpu_custom_call.1} parent=71 // pred_region
          %443 = dma.done [#allocation3], 1024
        $region76: #{tpu_custom_call.1} parent=71 // pred_fallthru
          _
        // Predicated region
        $region77: #{tpu_custom_call.1} parent=71 // pred_check
          %p444 = pneg %p198
        $region78: #{tpu_custom_call.1} parent=71 // pred_check_branch
          %446 = sbr.rel (%p444) target = $region80
        $region79: #{tpu_custom_call.1} parent=71 // pred_region
          %447 = dma.done [#allocation6], 1024
        $region80: #{tpu_custom_call.1} parent=71 // pred_fallthru
          _
        // Predicated region
        $region81: #{tpu_custom_call.1} parent=71 // pred_check
          %p448 = pneg %p240
        $region82: #{tpu_custom_call.1} parent=71 // pred_check_branch
          %450 = sbr.rel (%p448) target = $region84
        $region83: #{tpu_custom_call.1} parent=71 // pred_region
          %451 = dma.done [#allocation6], 1024
        $region84: #{tpu_custom_call.1} parent=71 // pred_fallthru
          _
        // Predicated region
        $region85: #{tpu_custom_call.1} parent=71 // pred_check
          %p452 = pneg %p282
        $region86: #{tpu_custom_call.1} parent=71 // pred_check_branch
          %454 = sbr.rel (%p452) target = $region88
        $region87: #{tpu_custom_call.1} parent=71 // pred_region
          %455 = dma.done [#allocation9], 2048
        $region88: #{tpu_custom_call.1} parent=71 // pred_fallthru
          _
        %s456 = smul.u32 4, %s30
        %p457 = scmp.lt.s32.totalorder %s456, 7
        %s458 = scalar_select %p457, %s456, 7
        %s459 = smul.addr %s458, 8
        %s460 = scalar_lea.vmem %s0, %s459
        %p461 = pneg %p51
        %p462 = pneg %p48
        %p463 = pneg %p72
        %p464 = pneg %p69
        %p465 = pneg %p93
        %p466 = pneg %p90
        %p467 = pneg %p114
        %p468 = pneg %p111
        %p469 = pneg %p135
        %p470 = pneg %p132
        %p471 = pneg %p156
        %p472 = pneg %p153
        %p473 = pneg %p177
        %p474 = pneg %p174
        %p475 = pneg %p198
        %p476 = pneg %p195
        %p477 = pneg %p219
        %p478 = pneg %p216
        %p479 = pneg %p240
        %p480 = pneg %p237
        %p481 = pneg %p261
        %p482 = pneg %p258
        %p483 = pneg %p282
        %p484 = pneg %p279
        %p485 = pneg %p303
        %p486 = pneg %p300
        %p487 = pneg %p329
        %p488 = pneg %p326
        %s489 = sand.u32 %s316, 1
        %s490 = scalar_lea.sflag [#allocation4], %s489
        %s491 = sand.u32 %s316, 1
        %s492 = smul.addr %s491, 32
        %s493 = scalar_lea.vmem [#allocation10], %s492
        %s494 = smul.u32 4, %s30
        %p495 = scmp.lt.s32.totalorder %s494, 7
        %s496 = scalar_select %p495, %s494, 7
        %s497 = smul.addr %s496, 8
        %s498 = scalar_lea.vmem %s0, %s497
        %s499 = smul.u32 4, %s30
        %s500 = smul.u32 4, %s30
        %v502 = vld [vmem:[%s498] sm:$0xff]
        %v503 = vld [vmem:[%s498 + $0x8] sm:$0xff]
        %v504 = vld [vmem:[%s498 + $0x10] sm:$0xff]
        %v505 = vld [vmem:[%s498 + $0x18] sm:$0xff]
        %v506 = vpack.c.bf16 %v503, %v502
        %v507 = vpack.c.bf16 %v505, %v504
        %v508 = vld [vmem:[%s1] sm:$0xff]
        %v509 = vld [vmem:[%s1 + $0x8] sm:$0xff]
        %v510 = vld [vmem:[%s2] sm:$0x3]
        %v512 = vlaneseq
        %v513 = vshrl.u32 %v512, 7
        %v514 = vsub.s32 0, %v513
        %v515 = vrot.slane %v510, %v514
        %v516 = vlaneseq
        %v517 = vshrl.u32 %v516, 7
        %v518 = vsub.s32 1, %v517
        %v519 = vrot.slane %v510, %v518
        %v524 = vunpack.c.l.b16 %v508
        %v525 = vunpack.c.h.b16 %v508
        %v526 = vunpack.c.l.b16 %v509
        %v527 = vunpack.c.h.b16 %v509
        %v528 = vpack.c.b16 %v526, %v524
        %v529 = vpack.c.b16 %v527, %v525
        %vm532 = vcmask 130048
        %v534 = vsel %vm532, %v506, 0
        %v537 = vsel %vm532, %v507, 0
        %539 = vmatprep.subr.bf16.mxu0 %v529
        %540 = vmatpush1.bf16.msra.mxu0 %v528
        %541 = vmatprep.subr.bf16.mxu0 0
        %542 = vmatpush1.bf16.msra.mxu0 0
        %543 = vmatprep.subr.bf16.mxu0 0
        %544 = vmatpush1.bf16.msra.mxu0 0
        %545 = vmatprep.subr.bf16.mxu0 0
        %546 = vmatpush1.bf16.msra.mxu0 0
        %547 = vmatprep.subr.bf16.mxu0 0
        %548 = vmatpush1.bf16.msra.mxu0 0
        %549 = vmatprep.subr.bf16.mxu0 0
        %550 = vmatpush1.bf16.msra.mxu0 0
        %551 = vmatprep.subr.bf16.mxu0 0
        %552 = vmatpush1.bf16.msra.mxu0 0
        %553 = vmatprep.subr.bf16.mxu0 0
        %554 = vmatpush1.bf16.msra.mxu0 0
        %555 = vmatprep.subr.bf16.mxu0 0
        %556 = vmatpush1.bf16.msra.mxu0 0
        %557 = vmatprep.subr.bf16.mxu0 0
        %558 = vmatpush1.bf16.msra.mxu0 0
        %559 = vmatprep.subr.bf16.mxu0 0
        %560 = vmatpush1.bf16.msra.mxu0 0
        %561 = vmatprep.subr.bf16.mxu0 0
        %562 = vmatpush1.bf16.msra.mxu0 0
        %563 = vmatprep.subr.bf16.mxu0 0
        %564 = vmatpush1.bf16.msra.mxu0 0
        %565 = vmatprep.subr.bf16.mxu0 0
        %566 = vmatpush1.bf16.msra.mxu0 0
        %567 = vmatprep.subr.bf16.mxu0 0
        %568 = vmatpush1.bf16.msra.mxu0 0
        %569 = vmatprep.subr.bf16.mxu0 0
        %570 = vmatpush1.bf16.msra.mxu0 0
        %571 = vmatprep.mubr.bf16.mxu0 0
        %572 = vmatmul.mubr.bf16.gmra.mrb[0].mxu0 %v534
        %v573 = vpop.f32.mrb[0].mxu0
        %v574 = vadd.f32 %v515, %v573
        %v575 = vpop.f32.mrb[0].mxu0
        %v576 = vadd.f32 %v519, %v575
        %v577 = vpop.f32.mrb[0].mxu0
        %v578 = vadd.f32 %v515, %v577
        %v579 = vpop.f32.mrb[0].mxu0
        %v580 = vadd.f32 %v519, %v579
        %581 = vmatprep.mubr.bf16.mxu0 0
        %582 = vmatmul.mubr.bf16.gmra.mrb[0].mxu0 %v537
        %v583 = vpop.f32.mrb[0].mxu0
        %v584 = vadd.f32 %v515, %v583
        %v585 = vpop.f32.mrb[0].mxu0
        %v586 = vadd.f32 %v519, %v585
        %v587 = vpop.f32.mrb[0].mxu0
        %v588 = vadd.f32 %v515, %v587
        %v589 = vpop.f32.mrb[0].mxu0
        %v590 = vadd.f32 %v519, %v589
        %591 = vdwg.mxu0
        %v592 = vmax.f32 %v574, 0.0
        %v593 = vmax.f32 %v576, 0.0
        %v594 = vmax.f32 %v578, 0.0
        %v595 = vmax.f32 %v580, 0.0
        %v596 = vmax.f32 %v584, 0.0
        %v597 = vmax.f32 %v586, 0.0
        %v598 = vmax.f32 %v588, 0.0
        %v599 = vmax.f32 %v590, 0.0
        %v600 = vpack.c.bf16 %v594, %v592
        %v601 = vpack.c.bf16 %v595, %v593
        %v602 = vpack.c.bf16 %v598, %v596
        %v603 = vpack.c.bf16 %v599, %v597
        %v604 = vld [vmem:[%s3] sm:$0xf]
        %v605 = vld [vmem:[%s3 + $0x4] sm:$0xf]
        %v606 = vld [vmem:[%s3 + $0x8] sm:$0xf]
        %v607 = vld [vmem:[%s3 + $0xc] sm:$0xf]
        %v608 = vld [vmem:[%s3 + $0x10] sm:$0xf]
        %v609 = vld [vmem:[%s3 + $0x14] sm:$0xf]
        %v610 = vld [vmem:[%s3 + $0x18] sm:$0xf]
        %v611 = vld [vmem:[%s3 + $0x1c] sm:$0xf]
        %v612 = vld [vmem:[%s3 + $0x20] sm:$0xf]
        %v613 = vld [vmem:[%s3 + $0x24] sm:$0xf]
        %v614 = vld [vmem:[%s3 + $0x28] sm:$0xf]
        %v615 = vld [vmem:[%s3 + $0x2c] sm:$0xf]
        %v616 = vld [vmem:[%s3 + $0x30] sm:$0xf]
        %v617 = vld [vmem:[%s3 + $0x34] sm:$0xf]
        %v618 = vld [vmem:[%s3 + $0x38] sm:$0xf]
        %v619 = vld [vmem:[%s3 + $0x3c] sm:$0xf]
        %v620 = vld [vmem:[%s4] sm:$0x1]
        %v622 = vlaneseq
        %v623 = vshrl.u32 %v622, 7
        %v624 = vsub.s32 0, %v623
        %v625 = vrot.slane %v620, %v624
        %v643 = vunpack.c.l.b16 %v604
        %v644 = vunpack.c.l.b16 %v605
        %v645 = vunpack.c.l.b16 %v606
        %v646 = vunpack.c.l.b16 %v607
        %v647 = vunpack.c.l.b16 %v608
        %v648 = vunpack.c.l.b16 %v609
        %v649 = vunpack.c.l.b16 %v610
        %v650 = vunpack.c.l.b16 %v611
        %v651 = vunpack.c.l.b16 %v612
        %v652 = vunpack.c.l.b16 %v613
        %v653 = vunpack.c.l.b16 %v614
        %v654 = vunpack.c.l.b16 %v615
        %v655 = vunpack.c.l.b16 %v616
        %v656 = vunpack.c.l.b16 %v617
        %v657 = vunpack.c.l.b16 %v618
        %v658 = vunpack.c.l.b16 %v619
        %v659 = vpack.c.b16 %v644, %v643
        %v660 = vpack.c.b16 %v646, %v645
        %v661 = vpack.c.b16 %v648, %v647
        %v662 = vpack.c.b16 %v650, %v649
        %v663 = vpack.c.b16 %v652, %v651
        %v664 = vpack.c.b16 %v654, %v653
        %v665 = vpack.c.b16 %v656, %v655
        %v666 = vpack.c.b16 %v658, %v657
        %675 = vmatprep.subr.bf16.mxu0 0
        %676 = vmatpush1.bf16.msra.mxu0 %v659
        %677 = vmatprep.subr.bf16.mxu0 0
        %678 = vmatpush1.bf16.msra.mxu0 %v660
        %679 = vmatprep.subr.bf16.mxu0 0
        %680 = vmatpush1.bf16.msra.mxu0 %v661
        %681 = vmatprep.subr.bf16.mxu0 0
        %682 = vmatpush1.bf16.msra.mxu0 %v662
        %683 = vmatprep.subr.bf16.mxu0 0
        %684 = vmatpush1.bf16.msra.mxu0 %v663
        %685 = vmatprep.subr.bf16.mxu0 0
        %686 = vmatpush1.bf16.msra.mxu0 %v664
        %687 = vmatprep.subr.bf16.mxu0 0
        %688 = vmatpush1.bf16.msra.mxu0 %v665
        %689 = vmatprep.subr.bf16.mxu0 0
        %690 = vmatpush1.bf16.msra.mxu0 %v666
        %691 = vmatprep.subr.bf16.mxu0 0
        %692 = vmatpush1.bf16.msra.mxu0 0
        %693 = vmatprep.subr.bf16.mxu0 0
        %694 = vmatpush1.bf16.msra.mxu0 0
        %695 = vmatprep.subr.bf16.mxu0 0
        %696 = vmatpush1.bf16.msra.mxu0 0
        %697 = vmatprep.subr.bf16.mxu0 0
        %698 = vmatpush1.bf16.msra.mxu0 0
        %699 = vmatprep.subr.bf16.mxu0 0
        %700 = vmatpush1.bf16.msra.mxu0 0
        %701 = vmatprep.subr.bf16.mxu0 0
        %702 = vmatpush1.bf16.msra.mxu0 0
        %703 = vmatprep.subr.bf16.mxu0 0
        %704 = vmatpush1.bf16.msra.mxu0 0
        %705 = vmatprep.subr.bf16.mxu0 0
        %706 = vmatpush1.bf16.msra.mxu0 0
        %707 = vmatprep.mubr.bf16.mxu0 0
        %708 = vmatmul.mubr.bf16.gmra.mrb[0].mxu0 %v600
        %v709 = vpop.f32.mrb[0].mxu0
        %v710 = vadd.f32 %v625, %v709
        %v711 = vpop.f32.mrb[0].mxu0
        %v712 = vpop.f32.mrb[0].mxu0
        %v713 = vadd.f32 %v625, %v712
        %v714 = vpop.f32.mrb[0].mxu0
        %715 = vmatprep.mubr.bf16.mxu0 0
        %716 = vmatmul.mubr.bf16.gmra.mrb[0].mxu0 %v602
        %v717 = vpop.f32.mrb[0].mxu0
        %v718 = vadd.f32 %v625, %v717
        %v719 = vpop.f32.mrb[0].mxu0
        %v720 = vpop.f32.mrb[0].mxu0
        %v721 = vadd.f32 %v625, %v720
        %v722 = vpop.f32.mrb[0].mxu0
        %723 = vdwg.mxu0
        %v724 = vmax.f32 %v710, 0.0
        %v725 = vmax.f32 %v713, 0.0
        %v726 = vmax.f32 %v718, 0.0
        %v727 = vmax.f32 %v721, 0.0
        %v728 = vpack.c.bf16 %v725, %v724
        %v729 = vpack.c.bf16 %v727, %v726
        %v730 = vld [vmem:[#allocation5] sm:$0xf]
        %v731 = vld [vmem:[#allocation5 + $0x4] sm:$0xf]
        %v732 = vld [vmem:[#allocation5 + $0x8] sm:$0xf]
        %v733 = vld [vmem:[#allocation5 + $0xc] sm:$0xf]
        %v734 = vld [vmem:[#allocation5 + $0x10] sm:$0xf]
        %v735 = vld [vmem:[#allocation5 + $0x14] sm:$0xf]
        %v736 = vld [vmem:[#allocation5 + $0x18] sm:$0xf]
        %v737 = vld [vmem:[#allocation5 + $0x1c] sm:$0xf]
        %v738 = vld [vmem:[#allocation5 + $0x20] sm:$0xf]
        %v739 = vld [vmem:[#allocation5 + $0x24] sm:$0xf]
        %v740 = vld [vmem:[#allocation5 + $0x28] sm:$0xf]
        %v741 = vld [vmem:[#allocation5 + $0x2c] sm:$0xf]
        %v742 = vld [vmem:[#allocation5 + $0x30] sm:$0xf]
        %v743 = vld [vmem:[#allocation5 + $0x34] sm:$0xf]
        %v744 = vld [vmem:[#allocation5 + $0x38] sm:$0xf]
        %v745 = vld [vmem:[#allocation5 + $0x3c] sm:$0xf]
        %v746 = vld [vmem:[%s8] sm:$0x1]
        %v748 = vlaneseq
        %v749 = vshrl.u32 %v748, 7
        %v750 = vsub.s32 0, %v749
        %v751 = vrot.slane %v746, %v750
        %v769 = vunpack.c.l.b16 %v730
        %v770 = vunpack.c.l.b16 %v731
        %v771 = vunpack.c.l.b16 %v732
        %v772 = vunpack.c.l.b16 %v733
        %v773 = vunpack.c.l.b16 %v734
        %v774 = vunpack.c.l.b16 %v735
        %v775 = vunpack.c.l.b16 %v736
        %v776 = vunpack.c.l.b16 %v737
        %v777 = vunpack.c.l.b16 %v738
        %v778 = vunpack.c.l.b16 %v739
        %v779 = vunpack.c.l.b16 %v740
        %v780 = vunpack.c.l.b16 %v741
        %v781 = vunpack.c.l.b16 %v742
        %v782 = vunpack.c.l.b16 %v743
        %v783 = vunpack.c.l.b16 %v744
        %v784 = vunpack.c.l.b16 %v745
        %v785 = vpack.c.b16 %v770, %v769
        %v786 = vpack.c.b16 %v772, %v771
        %v787 = vpack.c.b16 %v774, %v773
        %v788 = vpack.c.b16 %v776, %v775
        %v789 = vpack.c.b16 %v778, %v777
        %v790 = vpack.c.b16 %v780, %v779
        %v791 = vpack.c.b16 %v782, %v781
        %v792 = vpack.c.b16 %v784, %v783
        %801 = vmatprep.subr.bf16.mxu0 0
        %802 = vmatpush1.bf16.msra.mxu0 %v785
        %803 = vmatprep.subr.bf16.mxu0 0
        %804 = vmatpush1.bf16.msra.mxu0 %v786
        %805 = vmatprep.subr.bf16.mxu0 0
        %806 = vmatpush1.bf16.msra.mxu0 %v787
        %807 = vmatprep.subr.bf16.mxu0 0
        %808 = vmatpush1.bf16.msra.mxu0 %v788
        %809 = vmatprep.subr.bf16.mxu0 0
        %810 = vmatpush1.bf16.msra.mxu0 %v789
        %811 = vmatprep.subr.bf16.mxu0 0
        %812 = vmatpush1.bf16.msra.mxu0 %v790
        %813 = vmatprep.subr.bf16.mxu0 0
        %814 = vmatpush1.bf16.msra.mxu0 %v791
        %815 = vmatprep.subr.bf16.mxu0 0
        %816 = vmatpush1.bf16.msra.mxu0 %v792
        %817 = vmatprep.subr.bf16.mxu0 0
        %818 = vmatpush1.bf16.msra.mxu0 0
        %819 = vmatprep.subr.bf16.mxu0 0
        %820 = vmatpush1.bf16.msra.mxu0 0
        %821 = vmatprep.subr.bf16.mxu0 0
        %822 = vmatpush1.bf16.msra.mxu0 0
        %823 = vmatprep.subr.bf16.mxu0 0
        %824 = vmatpush1.bf16.msra.mxu0 0
        %825 = vmatprep.subr.bf16.mxu0 0
        %826 = vmatpush1.bf16.msra.mxu0 0
        %827 = vmatprep.subr.bf16.mxu0 0
        %828 = vmatpush1.bf16.msra.mxu0 0
        %829 = vmatprep.subr.bf16.mxu0 0
        %830 = vmatpush1.bf16.msra.mxu0 0
        %831 = vmatprep.subr.bf16.mxu0 0
        %832 = vmatpush1.bf16.msra.mxu0 0
        %833 = vmatprep.mubr.bf16.mxu0 0
        %834 = vmatmul.mubr.bf16.gmra.mrb[0].mxu0 %v601
        %v835 = vpop.f32.mrb[0].mxu0
        %v836 = vadd.f32 %v751, %v835
        %v837 = vpop.f32.mrb[0].mxu0
        %v838 = vpop.f32.mrb[0].mxu0
        %v839 = vadd.f32 %v751, %v838
        %v840 = vpop.f32.mrb[0].mxu0
        %841 = vmatprep.mubr.bf16.mxu0 0
        %842 = vmatmul.mubr.bf16.gmra.mrb[0].mxu0 %v603
        %v843 = vpop.f32.mrb[0].mxu0
        %v844 = vadd.f32 %v751, %v843
        %v845 = vpop.f32.mrb[0].mxu0
        %v846 = vpop.f32.mrb[0].mxu0
        %v847 = vadd.f32 %v751, %v846
        %v848 = vpop.f32.mrb[0].mxu0
        %849 = vdwg.mxu0
        %v850 = vmax.f32 %v836, 0.0
        %v851 = vmax.f32 %v839, 0.0
        %v852 = vmax.f32 %v844, 0.0
        %v853 = vmax.f32 %v847, 0.0
        %v854 = vpack.c.bf16 %v851, %v850
        %v855 = vpack.c.bf16 %v853, %v852
        %v856 = vld [vmem:[#allocation2] sm:$0xf]
        %v857 = vld [vmem:[#allocation2 + $0x4] sm:$0xf]
        %v858 = vld [vmem:[#allocation2 + $0x8] sm:$0xf]
        %v859 = vld [vmem:[#allocation2 + $0xc] sm:$0xf]
        %v860 = vld [vmem:[#allocation2 + $0x10] sm:$0xf]
        %v861 = vld [vmem:[#allocation2 + $0x14] sm:$0xf]
        %v862 = vld [vmem:[#allocation2 + $0x18] sm:$0xf]
        %v863 = vld [vmem:[#allocation2 + $0x1c] sm:$0xf]
        %v864 = vld [vmem:[#allocation2 + $0x20] sm:$0xf]
        %v865 = vld [vmem:[#allocation2 + $0x24] sm:$0xf]
        %v866 = vld [vmem:[#allocation2 + $0x28] sm:$0xf]
        %v867 = vld [vmem:[#allocation2 + $0x2c] sm:$0xf]
        %v868 = vld [vmem:[#allocation2 + $0x30] sm:$0xf]
        %v869 = vld [vmem:[#allocation2 + $0x34] sm:$0xf]
        %v870 = vld [vmem:[#allocation2 + $0x38] sm:$0xf]
        %v871 = vld [vmem:[#allocation2 + $0x3c] sm:$0xf]
        %v872 = vld [vmem:[%s6] sm:$0x1]
        %v874 = vlaneseq
        %v875 = vshrl.u32 %v874, 7
        %v876 = vsub.s32 0, %v875
        %v877 = vrot.slane %v872, %v876
        %v895 = vunpack.c.l.b16 %v856
        %v896 = vunpack.c.l.b16 %v857
        %v897 = vunpack.c.l.b16 %v858
        %v898 = vunpack.c.l.b16 %v859
        %v899 = vunpack.c.l.b16 %v860
        %v900 = vunpack.c.l.b16 %v861
        %v901 = vunpack.c.l.b16 %v862
        %v902 = vunpack.c.l.b16 %v863
        %v903 = vunpack.c.l.b16 %v864
        %v904 = vunpack.c.l.b16 %v865
        %v905 = vunpack.c.l.b16 %v866
        %v906 = vunpack.c.l.b16 %v867
        %v907 = vunpack.c.l.b16 %v868
        %v908 = vunpack.c.l.b16 %v869
        %v909 = vunpack.c.l.b16 %v870
        %v910 = vunpack.c.l.b16 %v871
        %v911 = vpack.c.b16 %v896, %v895
        %v912 = vpack.c.b16 %v898, %v897
        %v913 = vpack.c.b16 %v900, %v899
        %v914 = vpack.c.b16 %v902, %v901
        %v915 = vpack.c.b16 %v904, %v903
        %v916 = vpack.c.b16 %v906, %v905
        %v917 = vpack.c.b16 %v908, %v907
        %v918 = vpack.c.b16 %v910, %v909
        %927 = vmatprep.subr.bf16.mxu0 0
        %928 = vmatpush1.bf16.msra.mxu0 %v911
        %929 = vmatprep.subr.bf16.mxu0 0
        %930 = vmatpush1.bf16.msra.mxu0 %v912
        %931 = vmatprep.subr.bf16.mxu0 0
        %932 = vmatpush1.bf16.msra.mxu0 %v913
        %933 = vmatprep.subr.bf16.mxu0 0
        %934 = vmatpush1.bf16.msra.mxu0 %v914
        %935 = vmatprep.subr.bf16.mxu0 0
        %936 = vmatpush1.bf16.msra.mxu0 %v915
        %937 = vmatprep.subr.bf16.mxu0 0
        %938 = vmatpush1.bf16.msra.mxu0 %v916
        %939 = vmatprep.subr.bf16.mxu0 0
        %940 = vmatpush1.bf16.msra.mxu0 %v917
        %941 = vmatprep.subr.bf16.mxu0 0
        %942 = vmatpush1.bf16.msra.mxu0 %v918
        %943 = vmatprep.subr.bf16.mxu0 0
        %944 = vmatpush1.bf16.msra.mxu0 0
        %945 = vmatprep.subr.bf16.mxu0 0
        %946 = vmatpush1.bf16.msra.mxu0 0
        %947 = vmatprep.subr.bf16.mxu0 0
        %948 = vmatpush1.bf16.msra.mxu0 0
        %949 = vmatprep.subr.bf16.mxu0 0
        %950 = vmatpush1.bf16.msra.mxu0 0
        %951 = vmatprep.subr.bf16.mxu0 0
        %952 = vmatpush1.bf16.msra.mxu0 0
        %953 = vmatprep.subr.bf16.mxu0 0
        %954 = vmatpush1.bf16.msra.mxu0 0
        %955 = vmatprep.subr.bf16.mxu0 0
        %956 = vmatpush1.bf16.msra.mxu0 0
        %957 = vmatprep.subr.bf16.mxu0 0
        %958 = vmatpush1.bf16.msra.mxu0 0
        %959 = vmatprep.mubr.bf16.mxu0 0
        %960 = vmatmul.mubr.bf16.gmra.mrb[0].mxu0 %v728
        %v961 = vpop.f32.mrb[0].mxu0
        %v962 = vadd.f32 %v877, %v961
        %v963 = vpop.f32.mrb[0].mxu0
        %v964 = vpop.f32.mrb[0].mxu0
        %v965 = vadd.f32 %v877, %v964
        %v966 = vpop.f32.mrb[0].mxu0
        %967 = vmatprep.mubr.bf16.mxu0 0
        %968 = vmatmul.mubr.bf16.gmra.mrb[0].mxu0 %v729
        %v969 = vpop.f32.mrb[0].mxu0
        %v970 = vadd.f32 %v877, %v969
        %v971 = vpop.f32.mrb[0].mxu0
        %v972 = vpop.f32.mrb[0].mxu0
        %v973 = vadd.f32 %v877, %v972
        %v974 = vpop.f32.mrb[0].mxu0
        %975 = vdwg.mxu0
        %v976 = vmax.f32 %v962, 0.0
        %v977 = vmax.f32 %v965, 0.0
        %v978 = vmax.f32 %v970, 0.0
        %v979 = vmax.f32 %v973, 0.0
        %v980 = vpack.c.bf16 %v977, %v976
        %v981 = vpack.c.bf16 %v979, %v978
        %v982 = vld [vmem:[#allocation7] sm:$0xf]
        %v983 = vld [vmem:[#allocation7 + $0x4] sm:$0xf]
        %v984 = vld [vmem:[#allocation7 + $0x8] sm:$0xf]
        %v985 = vld [vmem:[#allocation7 + $0xc] sm:$0xf]
        %v986 = vld [vmem:[#allocation7 + $0x10] sm:$0xf]
        %v987 = vld [vmem:[#allocation7 + $0x14] sm:$0xf]
        %v988 = vld [vmem:[#allocation7 + $0x18] sm:$0xf]
        %v989 = vld [vmem:[#allocation7 + $0x1c] sm:$0xf]
        %v990 = vld [vmem:[#allocation7 + $0x20] sm:$0xf]
        %v991 = vld [vmem:[#allocation7 + $0x24] sm:$0xf]
        %v992 = vld [vmem:[#allocation7 + $0x28] sm:$0xf]
        %v993 = vld [vmem:[#allocation7 + $0x2c] sm:$0xf]
        %v994 = vld [vmem:[#allocation7 + $0x30] sm:$0xf]
        %v995 = vld [vmem:[#allocation7 + $0x34] sm:$0xf]
        %v996 = vld [vmem:[#allocation7 + $0x38] sm:$0xf]
        %v997 = vld [vmem:[#allocation7 + $0x3c] sm:$0xf]
        %v998 = vld [vmem:[%s10] sm:$0x1]
        %v1000 = vlaneseq
        %v1001 = vshrl.u32 %v1000, 7
        %v1002 = vsub.s32 0, %v1001
        %v1003 = vrot.slane %v998, %v1002
        %v1021 = vunpack.c.l.b16 %v982
        %v1022 = vunpack.c.l.b16 %v983
        %v1023 = vunpack.c.l.b16 %v984
        %v1024 = vunpack.c.l.b16 %v985
        %v1025 = vunpack.c.l.b16 %v986
        %v1026 = vunpack.c.l.b16 %v987
        %v1027 = vunpack.c.l.b16 %v988
        %v1028 = vunpack.c.l.b16 %v989
        %v1029 = vunpack.c.l.b16 %v990
        %v1030 = vunpack.c.l.b16 %v991
        %v1031 = vunpack.c.l.b16 %v992
        %v1032 = vunpack.c.l.b16 %v993
        %v1033 = vunpack.c.l.b16 %v994
        %v1034 = vunpack.c.l.b16 %v995
        %v1035 = vunpack.c.l.b16 %v996
        %v1036 = vunpack.c.l.b16 %v997
        %v1037 = vpack.c.b16 %v1022, %v1021
        %v1038 = vpack.c.b16 %v1024, %v1023
        %v1039 = vpack.c.b16 %v1026, %v1025
        %v1040 = vpack.c.b16 %v1028, %v1027
        %v1041 = vpack.c.b16 %v1030, %v1029
        %v1042 = vpack.c.b16 %v1032, %v1031
        %v1043 = vpack.c.b16 %v1034, %v1033
        %v1044 = vpack.c.b16 %v1036, %v1035
        %1053 = vmatprep.subr.bf16.mxu0 0
        %1054 = vmatpush1.bf16.msra.mxu0 %v1037
        %1055 = vmatprep.subr.bf16.mxu0 0
        %1056 = vmatpush1.bf16.msra.mxu0 %v1038
        %1057 = vmatprep.subr.bf16.mxu0 0
        %1058 = vmatpush1.bf16.msra.mxu0 %v1039
        %1059 = vmatprep.subr.bf16.mxu0 0
        %1060 = vmatpush1.bf16.msra.mxu0 %v1040
        %1061 = vmatprep.subr.bf16.mxu0 0
        %1062 = vmatpush1.bf16.msra.mxu0 %v1041
        %1063 = vmatprep.subr.bf16.mxu0 0
        %1064 = vmatpush1.bf16.msra.mxu0 %v1042
        %1065 = vmatprep.subr.bf16.mxu0 0
        %1066 = vmatpush1.bf16.msra.mxu0 %v1043
        %1067 = vmatprep.subr.bf16.mxu0 0
        %1068 = vmatpush1.bf16.msra.mxu0 %v1044
        %1069 = vmatprep.subr.bf16.mxu0 0
        %1070 = vmatpush1.bf16.msra.mxu0 0
        %1071 = vmatprep.subr.bf16.mxu0 0
        %1072 = vmatpush1.bf16.msra.mxu0 0
        %1073 = vmatprep.subr.bf16.mxu0 0
        %1074 = vmatpush1.bf16.msra.mxu0 0
        %1075 = vmatprep.subr.bf16.mxu0 0
        %1076 = vmatpush1.bf16.msra.mxu0 0
        %1077 = vmatprep.subr.bf16.mxu0 0
        %1078 = vmatpush1.bf16.msra.mxu0 0
        %1079 = vmatprep.subr.bf16.mxu0 0
        %1080 = vmatpush1.bf16.msra.mxu0 0
        %1081 = vmatprep.subr.bf16.mxu0 0
        %1082 = vmatpush1.bf16.msra.mxu0 0
        %1083 = vmatprep.subr.bf16.mxu0 0
        %1084 = vmatpush1.bf16.msra.mxu0 0
        %1085 = vmatprep.mubr.bf16.mxu0 0
        %1086 = vmatmul.mubr.bf16.gmra.mrb[0].mxu0 %v854
        %v1087 = vpop.f32.mrb[0].mxu0
        %v1088 = vadd.f32 %v1003, %v1087
        %v1089 = vpop.f32.mrb[0].mxu0
        %v1090 = vpop.f32.mrb[0].mxu0
        %v1091 = vadd.f32 %v1003, %v1090
        %v1092 = vpop.f32.mrb[0].mxu0
        %1093 = vmatprep.mubr.bf16.mxu0 0
        %1094 = vmatmul.mubr.bf16.gmra.mrb[0].mxu0 %v855
        %v1095 = vpop.f32.mrb[0].mxu0
        %v1096 = vadd.f32 %v1003, %v1095
        %v1097 = vpop.f32.mrb[0].mxu0
        %v1098 = vpop.f32.mrb[0].mxu0
        %v1099 = vadd.f32 %v1003, %v1098
        %v1100 = vpop.f32.mrb[0].mxu0
        %1101 = vdwg.mxu0
        %v1102 = vmax.f32 %v1088, 0.0
        %v1103 = vmax.f32 %v1091, 0.0
        %v1104 = vmax.f32 %v1096, 0.0
        %v1105 = vmax.f32 %v1099, 0.0
        %v1106 = vpack.c.bf16 %v1103, %v1102
        %v1107 = vpack.c.bf16 %v1105, %v1104
        %v1108 = vld [vmem:[#allocation8] sm:$0xf]
        %v1109 = vld [vmem:[#allocation8 + $0x4] sm:$0xf]
        %v1110 = vld [vmem:[#allocation8 + $0x8] sm:$0xf]
        %v1111 = vld [vmem:[#allocation8 + $0xc] sm:$0xf]
        %v1112 = vld [vmem:[#allocation8 + $0x10] sm:$0xf]
        %v1113 = vld [vmem:[#allocation8 + $0x14] sm:$0xf]
        %v1114 = vld [vmem:[#allocation8 + $0x18] sm:$0xf]
        %v1115 = vld [vmem:[#allocation8 + $0x1c] sm:$0xf]
        %v1116 = vld [vmem:[#allocation8 + $0x20] sm:$0xf]
        %v1117 = vld [vmem:[#allocation8 + $0x24] sm:$0xf]
        %v1118 = vld [vmem:[#allocation8 + $0x28] sm:$0xf]
        %v1119 = vld [vmem:[#allocation8 + $0x2c] sm:$0xf]
        %v1120 = vld [vmem:[#allocation8 + $0x30] sm:$0xf]
        %v1121 = vld [vmem:[#allocation8 + $0x34] sm:$0xf]
        %v1122 = vld [vmem:[#allocation8 + $0x38] sm:$0xf]
        %v1123 = vld [vmem:[#allocation8 + $0x3c] sm:$0xf]
        %v1124 = vld [vmem:[#allocation8 + $0x40] sm:$0xf]
        %v1125 = vld [vmem:[#allocation8 + $0x44] sm:$0xf]
        %v1126 = vld [vmem:[#allocation8 + $0x48] sm:$0xf]
        %v1127 = vld [vmem:[#allocation8 + $0x4c] sm:$0xf]
        %v1128 = vld [vmem:[#allocation8 + $0x50] sm:$0xf]
        %v1129 = vld [vmem:[#allocation8 + $0x54] sm:$0xf]
        %v1130 = vld [vmem:[#allocation8 + $0x58] sm:$0xf]
        %v1131 = vld [vmem:[#allocation8 + $0x5c] sm:$0xf]
        %v1132 = vld [vmem:[#allocation8 + $0x60] sm:$0xf]
        %v1133 = vld [vmem:[#allocation8 + $0x64] sm:$0xf]
        %v1134 = vld [vmem:[#allocation8 + $0x68] sm:$0xf]
        %v1135 = vld [vmem:[#allocation8 + $0x6c] sm:$0xf]
        %v1136 = vld [vmem:[#allocation8 + $0x70] sm:$0xf]
        %v1137 = vld [vmem:[#allocation8 + $0x74] sm:$0xf]
        %v1138 = vld [vmem:[#allocation8 + $0x78] sm:$0xf]
        %v1139 = vld [vmem:[#allocation8 + $0x7c] sm:$0xf]
        %v1140 = vld [vmem:[%s12] sm:$0x1]
        %v1142 = vlaneseq
        %v1143 = vshrl.u32 %v1142, 7
        %v1144 = vsub.s32 0, %v1143
        %v1145 = vrot.slane %v1140, %v1144
        %v1179 = vunpack.c.l.b16 %v1108
        %v1180 = vunpack.c.l.b16 %v1109
        %v1181 = vunpack.c.l.b16 %v1110
        %v1182 = vunpack.c.l.b16 %v1111
        %v1183 = vunpack.c.l.b16 %v1112
        %v1184 = vunpack.c.l.b16 %v1113
        %v1185 = vunpack.c.l.b16 %v1114
        %v1186 = vunpack.c.l.b16 %v1115
        %v1187 = vunpack.c.l.b16 %v1116
        %v1188 = vunpack.c.l.b16 %v1117
        %v1189 = vunpack.c.l.b16 %v1118
        %v1190 = vunpack.c.l.b16 %v1119
        %v1191 = vunpack.c.l.b16 %v1120
        %v1192 = vunpack.c.l.b16 %v1121
        %v1193 = vunpack.c.l.b16 %v1122
        %v1194 = vunpack.c.l.b16 %v1123
        %v1195 = vunpack.c.l.b16 %v1124
        %v1196 = vunpack.c.l.b16 %v1125
        %v1197 = vunpack.c.l.b16 %v1126
        %v1198 = vunpack.c.l.b16 %v1127
        %v1199 = vunpack.c.l.b16 %v1128
        %v1200 = vunpack.c.l.b16 %v1129
        %v1201 = vunpack.c.l.b16 %v1130
        %v1202 = vunpack.c.l.b16 %v1131
        %v1203 = vunpack.c.l.b16 %v1132
        %v1204 = vunpack.c.l.b16 %v1133
        %v1205 = vunpack.c.l.b16 %v1134
        %v1206 = vunpack.c.l.b16 %v1135
        %v1207 = vunpack.c.l.b16 %v1136
        %v1208 = vunpack.c.l.b16 %v1137
        %v1209 = vunpack.c.l.b16 %v1138
        %v1210 = vunpack.c.l.b16 %v1139
        %v1211 = vpack.c.b16 %v1180, %v1179
        %v1212 = vpack.c.b16 %v1182, %v1181
        %v1213 = vpack.c.b16 %v1184, %v1183
        %v1214 = vpack.c.b16 %v1186, %v1185
        %v1215 = vpack.c.b16 %v1188, %v1187
        %v1216 = vpack.c.b16 %v1190, %v1189
        %v1217 = vpack.c.b16 %v1192, %v1191
        %v1218 = vpack.c.b16 %v1194, %v1193
        %v1219 = vpack.c.b16 %v1196, %v1195
        %v1220 = vpack.c.b16 %v1198, %v1197
        %v1221 = vpack.c.b16 %v1200, %v1199
        %v1222 = vpack.c.b16 %v1202, %v1201
        %v1223 = vpack.c.b16 %v1204, %v1203
        %v1224 = vpack.c.b16 %v1206, %v1205
        %v1225 = vpack.c.b16 %v1208, %v1207
        %v1226 = vpack.c.b16 %v1210, %v1209
        %1243 = vmatprep.subr.bf16.mxu0 0
        %1244 = vmatpush1.bf16.msra.mxu0 %v1211
        %1245 = vmatprep.subr.bf16.mxu0 0
        %1246 = vmatpush1.bf16.msra.mxu0 %v1212
        %1247 = vmatprep.subr.bf16.mxu0 0
        %1248 = vmatpush1.bf16.msra.mxu0 %v1213
        %1249 = vmatprep.subr.bf16.mxu0 0
        %1250 = vmatpush1.bf16.msra.mxu0 %v1214
        %1251 = vmatprep.subr.bf16.mxu0 0
        %1252 = vmatpush1.bf16.msra.mxu0 %v1215
        %1253 = vmatprep.subr.bf16.mxu0 0
        %1254 = vmatpush1.bf16.msra.mxu0 %v1216
        %1255 = vmatprep.subr.bf16.mxu0 0
        %1256 = vmatpush1.bf16.msra.mxu0 %v1217
        %1257 = vmatprep.subr.bf16.mxu0 0
        %1258 = vmatpush1.bf16.msra.mxu0 %v1218
        %1259 = vmatprep.subr.bf16.mxu0 0
        %1260 = vmatpush1.bf16.msra.mxu0 %v1219
        %1261 = vmatprep.subr.bf16.mxu0 0
        %1262 = vmatpush1.bf16.msra.mxu0 %v1220
        %1263 = vmatprep.subr.bf16.mxu0 0
        %1264 = vmatpush1.bf16.msra.mxu0 %v1221
        %1265 = vmatprep.subr.bf16.mxu0 0
        %1266 = vmatpush1.bf16.msra.mxu0 %v1222
        %1267 = vmatprep.subr.bf16.mxu0 0
        %1268 = vmatpush1.bf16.msra.mxu0 %v1223
        %1269 = vmatprep.subr.bf16.mxu0 0
        %1270 = vmatpush1.bf16.msra.mxu0 %v1224
        %1271 = vmatprep.subr.bf16.mxu0 0
        %1272 = vmatpush1.bf16.msra.mxu0 %v1225
        %1273 = vmatprep.subr.bf16.mxu0 0
        %1274 = vmatpush1.bf16.msra.mxu0 %v1226
        %1275 = vmatprep.mubr.bf16.mxu0 %v1106
        %1276 = vmatmul.mubr.bf16.gmra.mrb[0].mxu0 %v980
        %v1277 = vpop.f32.mrb[0].mxu0
        %v1278 = vadd.f32 %v1145, %v1277
        %v1279 = vpop.f32.mrb[0].mxu0
        %v1280 = vpop.f32.mrb[0].mxu0
        %v1281 = vadd.f32 %v1145, %v1280
        %v1282 = vpop.f32.mrb[0].mxu0
        %1283 = vmatprep.mubr.bf16.mxu0 %v1107
        %1284 = vmatmul.mubr.bf16.gmra.mrb[0].mxu0 %v981
        %v1285 = vpop.f32.mrb[0].mxu0
        %v1286 = vadd.f32 %v1145, %v1285
        %v1287 = vpop.f32.mrb[0].mxu0
        %v1288 = vpop.f32.mrb[0].mxu0
        %v1289 = vadd.f32 %v1145, %v1288
        %v1290 = vpop.f32.mrb[0].mxu0
        %1291 = vdwg.mxu0
        %1292 = vst [vmem:[%s493] sm:$0xff] %v1278
        %1293 = vst [vmem:[%s493 + $0x8] sm:$0xff] %v1281
        %1294 = vst [vmem:[%s493 + $0x10] sm:$0xff] %v1286
        %1295 = vst [vmem:[%s493 + $0x18] sm:$0xff] %v1289
        %s1296 = sand.u32 %s316, 1
        %s1297 = scalar_lea.sflag [#allocation4], %s1296
        %s1298 = sand.u32 %s316, 1
        %s1299 = smul.addr %s1298, 32
        %s1300 = scalar_lea.vmem [#allocation10], %s1299
        // Predicated region
        $region89: #{tpu_custom_call.1} parent=71 // pred_check
          %p1301 = pneg %p326
        $region90: #{tpu_custom_call.1} parent=71 // pred_check_branch
          %1303 = sbr.rel (%p1301) target = $region92
        $region91: #{tpu_custom_call.1} parent=71 // pred_region
          %s1304 = smul.u32 4, %s30
          %s1306 = ssub.s32 512, 512
          %1307 = vsyncadd %s1297, %s1306
          %s1308 = smul.addr %s1304, 128
          %s1309 = scalar_lea.hbm %s13, %s1308
          %s1310 = sshll.u32 %s1300, 4
          %s1311 = int_to_ptr.vmem [resolvable:$true] %s1310
          %1316 = dma.vmem_to_hbm [thread:$0]  %s1311, 512, %s1309, %s1297, 128, 128, 8
        $region92: #{tpu_custom_call.1} parent=71 // pred_fallthru
          _
      $region72: #{tpu_custom_call.1} parent=5 // pred_fallthru
        _
      %p1317 = scmp.le.s32.totalorder 2, %s25
      // Predicated region
      $region93: #{tpu_custom_call.1} parent=5 // pred_check
        %p1318 = pneg %p1317
      $region94: #{tpu_custom_call.1} parent=5 // pred_check_branch
        %1320 = sbr.rel (%p1318) target = $region96
      $region95: #{tpu_custom_call.1} parent=5 // pred_region
        %s1321 = ssub.s32 %s25, 2
        // Predicated region
        $region97: #{tpu_custom_call.1} parent=95 // pred_check
          %p1322 = pneg %p332
        $region98: #{tpu_custom_call.1} parent=95 // pred_check_branch
          %1324 = sbr.rel (%p1322) target = $region100
        $region99: #{tpu_custom_call.1} parent=95 // pred_region
          %s1325 = sand.u32 %s317, 1
          %s1326 = scalar_lea.sflag [#allocation4], %s1325
          %s1327 = sand.u32 %s317, 1
          %s1328 = smul.addr %s1327, 32
          %s1329 = scalar_lea.vmem [#allocation10], %s1328
          %1330 = dma.done %s1326, 512
        $region100: #{tpu_custom_call.1} parent=95 // pred_fallthru
          _
      $region96: #{tpu_custom_call.1} parent=5 // pred_fallthru
        _
    $region6: #{tpu_custom_call.1} parent=1 // loop_footer
      %s29 = sadd.s32 1, %s25
    $region7: #{tpu_custom_call.1} parent=1 // loop_footer_branch
      %24 = sbr.rel target = $region3
    $region8: #{tpu_custom_call.1} parent=1 // loop_exit
      _
    %1331 = vsyncpa [#allocation3], 1
    %s1332 = scalar_lea.sflag [#allocation3], 1
    %1333 = vsyncpa %s1332, 1
    %1334 = vsyncpa [#allocation6], 1
    %1335 = vsyncpa [#allocation9], 1
    %1336 = vsyncpa [#allocation4], 1
    %s1337 = scalar_lea.sflag [#allocation4], 1
    %1338 = vsyncpa %s1337, 1

</llo_original>
